<compile_context>
chip_gen: v5e
topology: v5e:2x2
jax: 0.10.0
libtpu: 0.0.40
codegen_flags: <defaults>
</compile_context>

<pallas_src>
import functools

import jax
import jax.numpy as jnp
from jax.experimental import pallas as pl
from jax.experimental.pallas import tpu as pltpu


def _round_up(x, m):
    return ((x + m - 1) // m) * m


# --------------------------------------------------------------------------
# Kernel 1: codebook_projection (nn.Linear) applied to tok_embeddings.weight.
# Per tile of `tw` codewords it emits:
#   cb   (tw, E)  f32  : exact projected codebook   -> final z_q gather
#   cbT  (E, tw)  bf16 : transposed / lane-dense    -> VQ distance matmul (MXU)
#   cb2  (1, tw)  f32  : exact ||cb||^2, lane-dense -> VQ distance bias
# --------------------------------------------------------------------------
def codebook_proj_kernel(emb_ref, wp_ref, bp_row_ref, bp_col_ref,
                         cb_ref, cbT_ref, cb2_ref):
    emb = emb_ref[...]                                     # (tw, cdim) f32
    wp = wp_ref[...]                                       # (E, cdim)  f32
    # cb = emb @ wp^T + bp                                   (tw, E)
    cb = jax.lax.dot_general(
        emb, wp, dimension_numbers=(((1,), (1,)), ((), ())),
        preferred_element_type=jnp.float32) + bp_row_ref[...]
    # cbT = wp @ emb^T + bp[:, None]                         (E, tw)
    # (computed directly in transposed layout so the hot VQ loop never has to
    #  transpose codebook tiles through the XLU)
    cbT = jax.lax.dot_general(
        wp, emb, dimension_numbers=(((1,), (1,)), ((), ())),
        preferred_element_type=jnp.float32) + bp_col_ref[...]
    cb_ref[...] = cb
    cbT_ref[...] = cbT.astype(cbT_ref.dtype)
    cb2_ref[...] = jnp.sum(cbT * cbT, axis=0, keepdims=True)


def codebook_projection(tok_emb, wp, bp, *, tw, mxu_dtype=jnp.bfloat16):
    Kp, cdim = tok_emb.shape
    E = wp.shape[0]
    bp_row = bp.reshape(1, E)
    bp_col = bp.reshape(E, 1)
    cb, cbT, cb2 = pl.pallas_call(
        codebook_proj_kernel,
        out_shape=(
            jax.ShapeDtypeStruct((Kp, E), jnp.float32),
            jax.ShapeDtypeStruct((E, Kp), mxu_dtype),
            jax.ShapeDtypeStruct((1, Kp), jnp.float32),
        ),
        grid=(Kp // tw,),
        in_specs=[
            pl.BlockSpec((tw, cdim), lambda i: (i, 0)),    # codebook rows tile
            pl.BlockSpec((E, cdim), lambda i: (0, 0)),     # projection weight
            pl.BlockSpec((1, E), lambda i: (0, 0)),        # bias (row)
            pl.BlockSpec((E, 1), lambda i: (0, 0)),        # bias (col)
        ],
        out_specs=(
            pl.BlockSpec((tw, E), lambda i: (i, 0)),
            pl.BlockSpec((E, tw), lambda i: (0, i)),
            pl.BlockSpec((1, tw), lambda i: (0, i)),
        ),
        compiler_params=pltpu.CompilerParams(dimension_semantics=("parallel",)),
    )(tok_emb, wp, bp_row, bp_col)
    return cb, cbT, cb2


# --------------------------------------------------------------------------
# Kernel 2: quant_conv (1x1) + VQ argmin.
#   grid = (token_tiles,) only ("parallel" -> megacore / both v7x TCs).
#   The whole projected codebook (cbT bf16, cb2 f32) is VMEM-resident
#   (constant-index BlockSpecs); a fori_loop walks K in `tk`-wide chunks and
#   carries a running (min, argmin). Only the indices are written out; the
#   codebook lookup for z_q is deferred to a wrapper-side f32 gather.
# --------------------------------------------------------------------------
def vq_argmin_kernel(x_ref, wqT_ref, bq_ref, cbT_ref, cb2_ref, idx_ref,
                     *, tk, num_k_tiles):
    # quant_conv (1x1 conv == per-token matmul): z = x @ Wq^T + bq   (f32)
    z = jnp.dot(x_ref[...], wqT_ref[...],
                preferred_element_type=jnp.float32) + bq_ref[...]
    # Fold the -2 of ||z - cb||^2 into z once per token tile. ||z||^2 is a
    # per-row constant and argmin-invariant, so it is dropped entirely.
    # NOTE: the bf16 cast can flip the argmin on near-tied distances relative
    # to the f32 PyTorch reference (acceptable for VQ).
    zm2 = (-2.0 * z).astype(cbT_ref.dtype)                     # (tm, E)
    tm = zm2.shape[0]
    # lane ids built once per token tile, reused for every K chunk
    lane = jax.lax.broadcasted_iota(jnp.int32, (tm, tk), 1)

    def body(j, carry):
        best_min, best_idx = carry
        off = pl.multiple_of(j * tk, 128)
        cbT_tile = cbT_ref[:, pl.ds(off, tk)]                  # (E, tk) bf16
        cb2_tile = cb2_ref[:, pl.ds(off, tk)]                  # (1, tk) f32
        # d = ||cb||^2 - 2 z.cb        (tm, tk), f32 accumulation on the MXU
        d = jnp.dot(zm2, cbT_tile,
                    preferred_element_type=jnp.float32) + cb2_tile
        local_min = jnp.min(d, axis=1, keepdims=True)          # (tm, 1)
        local_arg = jnp.min(jnp.where(d == local_min, lane, tk),
                            axis=1, keepdims=True)             # first occurrence
        improved = local_min < best_min                        # strict < keeps global first
        best_idx = jnp.where(improved, local_arg + j * tk, best_idx)
        best_min = jnp.minimum(best_min, local_min)
        return best_min, best_idx

    init = (jnp.full((tm, 1), jnp.inf, jnp.float32),
            jnp.zeros((tm, 1), jnp.int32))
    _, best_idx = jax.lax.fori_loop(0, num_k_tiles, body, init)
    idx_ref[...] = best_idx


def vq_argmin(x_tok, wqT, bq_row, cbT, cb2, *, tm, tk):
    Np, zc = x_tok.shape
    E, Kp = cbT.shape
    num_k_tiles = Kp // tk
    kernel = functools.partial(vq_argmin_kernel, tk=tk, num_k_tiles=num_k_tiles)
    idx = pl.pallas_call(
        kernel,
        out_shape=jax.ShapeDtypeStruct((Np, 1), jnp.int32),
        grid=(Np // tm,),
        in_specs=[
            pl.BlockSpec((tm, zc), lambda i: (i, 0)),   # token tile
            pl.BlockSpec((zc, E), lambda i: (0, 0)),    # quant_conv weight^T
            pl.BlockSpec((1, E), lambda i: (0, 0)),     # quant_conv bias
            pl.BlockSpec((E, Kp), lambda i: (0, 0)),    # full codebook (bf16), resident
            pl.BlockSpec((1, Kp), lambda i: (0, 0)),    # full ||cb||^2 row, resident
        ],
        out_specs=pl.BlockSpec((tm, 1), lambda i: (i, 0)),
        compiler_params=pltpu.CompilerParams(
            dimension_semantics=("parallel",),
            # <= 48 MiB keeps the same config safe on v7x's 64 MiB per-TC VMEM
            vmem_limit_bytes=48 * 1024 * 1024,
        ),
    )(x_tok, wqT, bq_row, cbT, cb2)
    return idx


# --------------------------------------------------------------------------
# Stage-2 forward: returns (quant[B, embed_dim, H, W], tk_labels[B, H*W])
# --------------------------------------------------------------------------
def vq_forward(h_enc, params, *, tm=256, tk=2048, mxu_dtype=jnp.bfloat16):
    B, zc, H, W = h_enc.shape
    E = params["wq"].shape[0]
    K, cdim = params["tok_emb"].shape
    N = B * H * W

    # ---- tile sizes / padding ------------------------------------------------
    tk = _round_up(max(128, min(tk, _round_up(K, 128))), 128)   # K chunk (lanes)
    Kp = _round_up(K, tk)
    tm = _round_up(min(tm, _round_up(N, 8)), 8)
    if N >= 16:
        # keep >= 2 token tiles so both v7x TensorCores / megacore get work
        tm = min(tm, _round_up((N + 1) // 2, 8))
    tm = max(tm, 8)
    Np = _round_up(N, tm)

    # projection tile over codewords (must divide Kp; cap VMEM for huge cdim)
    tw = tk
    if tw * cdim * 4 > (8 << 20):
        for cand in (1024, 512, 256, 128):
            if Kp % cand == 0:
                tw = cand
                break

    # ---- codebook projection (once): cb = tok_emb @ Wp^T + bp ----------------
    tok_emb = params["tok_emb"]
    if Kp != K:
        tok_emb = jnp.pad(tok_emb, ((0, Kp - K), (0, 0)))
    cb, cbT, cb2 = codebook_projection(
        tok_emb, params["wp"], params["bp"], tw=tw, mxu_dtype=mxu_dtype)
    if Kp != K:
        # padded codewords can never win the argmin
        cb2 = jnp.where(jnp.arange(Kp)[None, :] < K, cb2, jnp.inf)

    # ---- tokens: NCHW -> (N, z_channels) --------------------------------------
    # TODO(synk): if the downstream consumer accepts NHWC these relayouts (and
    # the final transpose back) can be dropped entirely.
    x_tok = jnp.transpose(h_enc, (0, 2, 3, 1)).reshape(N, zc)
    if Np != N:
        x_tok = jnp.pad(x_tok, ((0, Np - N), (0, 0)))
    wqT = params["wq"].T                    # (z_channels, embed_dim)
    bq_row = params["bq"].reshape(1, E)

    # ---- fused quant_conv + argmin kernel -------------------------------------
    idx = vq_argmin(x_tok, wqT, bq_row, cbT, cb2, tm=tm, tk=tk)
    idx_flat = idx[:N, 0]

    # ---- deferred codebook lookup (exact f32 codebook) ------------------------
    z_q = jnp.take(cb, idx_flat, axis=0)                       # (N, E) f32
    quant = jnp.transpose(z_q.reshape(B, H, W, E), (0, 3, 1, 2))
    tk_labels = idx_flat.reshape(B, H * W)
    return quant, tk_labels


if __name__ == "__main__":
    # Small synthetic shapes consistent with the module (tuning_codebook=-1 path):
    B, z_channels, H, W = 2, 16, 16, 16
    embed_dim = 32
    n_vision_words = 1000       # non-multiple of 128 so codebook padding /
                                # inf-masking and the multi-chunk K loop run
    codebook_dim = embed_dim

    key = jax.random.PRNGKey(0)
    k = jax.random.split(key, 6)
    params = {
        # tok_embeddings.weight ~ U(-1/n, 1/n)
        "tok_emb": jax.random.uniform(
            k[0], (n_vision_words, codebook_dim), jnp.float32,
            minval=-1.0 / n_vision_words, maxval=1.0 / n_vision_words),
        # codebook_projection: Linear(codebook_dim, embed_dim), weight std = embed_dim^-0.5
        "wp": jax.random.normal(k[1], (embed_dim, codebook_dim), jnp.float32)
              * embed_dim ** -0.5,
        "bp": jax.random.uniform(k[2], (embed_dim,), jnp.float32,
                                 minval=-codebook_dim ** -0.5,
                                 maxval=codebook_dim ** -0.5),
        # quant_conv: Conv2d(z_channels, embed_dim, 1) -> weight (embed_dim, z_channels)
        "wq": jax.random.normal(k[3], (embed_dim, z_channels), jnp.float32)
              * z_channels ** -0.5,
        "bq": jax.random.uniform(k[4], (embed_dim,), jnp.float32,
                                 minval=-z_channels ** -0.5,
                                 maxval=z_channels ** -0.5),
    }

    # TODO(synk): self.encoder / self.decoder are external taming-transformers
    # modules (not defined in this file); `h_enc` stands in for the Encoder
    # output (B, z_channels, H, W). The Decoder / post_quant_conv branch is
    # never reached when stage == 2.
    h_enc = jax.random.normal(k[5], (B, z_channels, H, W), jnp.float32)

    # tm=256 -> 2 token tiles (both TCs busy); tk=256 -> Kp=1024, 4 in-kernel
    # K chunks so the running argmin and the padded-codeword mask are exercised.
    fwd = jax.jit(functools.partial(vq_forward, tm=256, tk=256))
    quant, tk_labels = fwd(h_enc, params)
    jax.block_until_ready((quant, tk_labels))

    assert quant.shape == (B, embed_dim, H, W) and quant.dtype == jnp.float32
    assert tk_labels.shape == (B, H * W) and tk_labels.dtype == jnp.int32
    assert bool(jnp.all(jnp.isfinite(quant)))
    assert int(tk_labels.min()) >= 0 and int(tk_labels.max()) < n_vision_words

    # Pure-JAX f32 reference sanity checks (generous tolerances: bf16-rounded
    # -2*z term means near-tied argmins may legitimately differ).
    cb_ref = params["tok_emb"] @ params["wp"].T + params["bp"]            # (K, E)
    z_ref = (jnp.transpose(h_enc, (0, 2, 3, 1)).reshape(-1, z_channels)
             @ params["wq"].T + params["bq"])                             # (N, E)
    d_ref = (jnp.sum(z_ref ** 2, 1, keepdims=True)
             + jnp.sum(cb_ref ** 2, 1)
             - 2.0 * (z_ref @ cb_ref.T))
    d_min = jnp.min(d_ref, axis=1)
    d_sel = jnp.take_along_axis(d_ref, tk_labels.reshape(-1, 1), axis=1)[:, 0]
    assert bool(jnp.all(d_sel - d_min <= 5e-2 * (1.0 + jnp.abs(d_min))))
    # quant rows must equal the (f32) projected codeword of the chosen index
    quant_tok = jnp.transpose(quant, (0, 2, 3, 1)).reshape(-1, embed_dim)
    ref_zq = jnp.take(cb_ref, tk_labels.reshape(-1), axis=0)
    assert bool(jnp.allclose(quant_tok, ref_zq, atol=5e-3, rtol=5e-3))

    print("KERNEL_OK")
</pallas_src>

<mosaic_0001>
module attributes {stable_mosaic.version = 11 : i64} {
  func.func @codebook_proj_kernel(%arg0: i32, %arg1: memref<256x32xf32, #tpu.memory_space<vmem>>, %arg2: memref<32x32xf32, #tpu.memory_space<vmem>>, %arg3: memref<1x32xf32, #tpu.memory_space<vmem>>, %arg4: memref<32x1xf32, #tpu.memory_space<vmem>>, %arg5: memref<256x32xf32, #tpu.memory_space<vmem>>, %arg6: memref<32x256xbf16, #tpu.memory_space<vmem>>, %arg7: memref<1x256xf32, #tpu.memory_space<vmem>>) attributes {dimension_semantics = [#tpu.dimension_semantics<parallel>], iteration_bounds = array<i64: 4>, scalar_prefetch = 0 : i64, scratch_operands = 0 : i64, tpu.core_type = #tpu.core_type<tc>, window_params = [{transform_indices = @transform_0, window_bounds = array<i64: 256, 32>}, {pipeline_mode = #tpu.pipeline_mode<synchronous>, transform_indices = @transform_1, window_bounds = array<i64: 32, 32>}, {pipeline_mode = #tpu.pipeline_mode<synchronous>, transform_indices = @transform_2, window_bounds = array<i64: 1, 32>}, {pipeline_mode = #tpu.pipeline_mode<synchronous>, transform_indices = @transform_3, window_bounds = array<i64: 32, 1>}, {transform_indices = @transform_4, window_bounds = array<i64: 256, 32>}, {transform_indices = @transform_5, window_bounds = array<i64: 32, 256>}, {transform_indices = @transform_6, window_bounds = array<i64: 1, 256>}]} {
    %c0 = arith.constant 0 : index
    %c0_0 = arith.constant 0 : index
    %0 = vector.load %arg1[%c0, %c0_0] : memref<256x32xf32, #tpu.memory_space<vmem>>, vector<256x32xf32>
    %c0_1 = arith.constant 0 : index
    %c0_2 = arith.constant 0 : index
    %1 = vector.load %arg2[%c0_1, %c0_2] : memref<32x32xf32, #tpu.memory_space<vmem>>, vector<32x32xf32>
    %cst = arith.constant dense<0.000000e+00> : vector<256x32xf32>
    %2 = tpu.matmul %0, %1, %cst {dimension_numbers = #tpu.dot_dimension_numbers<[1], [1], [0], [0], [0, 0, 1, 0], [], []>} : vector<256x32xf32>, vector<32x32xf32>, vector<256x32xf32> -> vector<256x32xf32>
    %c0_3 = arith.constant 0 : index
    %c0_4 = arith.constant 0 : index
    %3 = vector.load %arg3[%c0_3, %c0_4] : memref<1x32xf32, #tpu.memory_space<vmem>>, vector<1x32xf32>
    %4 = vector.broadcast %3 : vector<1x32xf32> to vector<256x32xf32>
    %5 = arith.addf %2, %4 : vector<256x32xf32>
    %cst_5 = arith.constant dense<0.000000e+00> : vector<32x256xf32>
    %6 = tpu.matmul %1, %0, %cst_5 {dimension_numbers = #tpu.dot_dimension_numbers<[1], [1], [0], [0], [0, 0, 1, 0], [], []>} : vector<32x32xf32>, vector<256x32xf32>, vector<32x256xf32> -> vector<32x256xf32>
    %c0_6 = arith.constant 0 : index
    %c0_7 = arith.constant 0 : index
    %7 = vector.load %arg4[%c0_6, %c0_7] : memref<32x1xf32, #tpu.memory_space<vmem>>, vector<32x1xf32>
    %8 = vector.broadcast %7 : vector<32x1xf32> to vector<32x256xf32>
    %9 = arith.addf %6, %8 : vector<32x256xf32>
    %c0_8 = arith.constant 0 : index
    %c0_9 = arith.constant 0 : index
    %10 = vector.load %arg5[%c0_8, %c0_9] : memref<256x32xf32, #tpu.memory_space<vmem>>, vector<256x32xf32>
    tpu.vector_store %arg5[%c0_8, %c0_9], %5 {strides = array<i32>} : memref<256x32xf32, #tpu.memory_space<vmem>>, vector<256x32xf32>,
    %11 = arith.truncf %9 : vector<32x256xf32> to vector<32x256xbf16>
    %c0_10 = arith.constant 0 : index
    %c0_11 = arith.constant 0 : index
    %12 = vector.load %arg6[%c0_10, %c0_11] : memref<32x256xbf16, #tpu.memory_space<vmem>>, vector<32x256xbf16>
    tpu.vector_store %arg6[%c0_10, %c0_11], %11 {strides = array<i32>} : memref<32x256xbf16, #tpu.memory_space<vmem>>, vector<32x256xbf16>,
    %13 = arith.mulf %9, %9 : vector<32x256xf32>
    %cst_12 = arith.constant dense<0.000000e+00> : vector<256xf32>
    %14 = vector.multi_reduction <add>, %13, %cst_12 [0] : vector<32x256xf32> to vector<256xf32>
    %15 = vector.shape_cast %14 : vector<256xf32> to vector<1x256xf32>
    %c0_13 = arith.constant 0 : index
    %c0_14 = arith.constant 0 : index
    %16 = vector.load %arg7[%c0_13, %c0_14] : memref<1x256xf32, #tpu.memory_space<vmem>>, vector<1x256xf32>
    tpu.vector_store %arg7[%c0_13, %c0_14], %15 {strides = array<i32>} : memref<1x256xf32, #tpu.memory_space<vmem>>, vector<1x256xf32>,
    return
  }
  func.func @transform_0(%arg0: i32) -> (i32, i32) {
    %c0_i32 = arith.constant 0 : i32
    %c0_i32_0 = arith.constant 0 : i32
    return %arg0, %c0_i32 : i32, i32
  }
  func.func @transform_1(%arg0: i32) -> (i32, i32) {
    %c0_i32 = arith.constant 0 : i32
    %c0_i32_0 = arith.constant 0 : i32
    %c0_i32_1 = arith.constant 0 : i32
    return %c0_i32, %c0_i32_0 : i32, i32
  }
  func.func @transform_2(%arg0: i32) -> (i32, i32) {
    %c0_i32 = arith.constant 0 : i32
    %c0_i32_0 = arith.constant 0 : i32
    %c0_i32_1 = arith.constant 0 : i32
    return %c0_i32, %c0_i32_0 : i32, i32
  }
  func.func @transform_3(%arg0: i32) -> (i32, i32) {
    %c0_i32 = arith.constant 0 : i32
    %c0_i32_0 = arith.constant 0 : i32
    %c0_i32_1 = arith.constant 0 : i32
    return %c0_i32, %c0_i32_0 : i32, i32
  }
  func.func @transform_4(%arg0: i32) -> (i32, i32) {
    %c0_i32 = arith.constant 0 : i32
    %c0_i32_0 = arith.constant 0 : i32
    return %arg0, %c0_i32 : i32, i32
  }
  func.func @transform_5(%arg0: i32) -> (i32, i32) {
    %c0_i32 = arith.constant 0 : i32
    %c0_i32_0 = arith.constant 0 : i32
    return %c0_i32, %arg0 : i32, i32
  }
  func.func @transform_6(%arg0: i32) -> (i32, i32) {
    %c0_i32 = arith.constant 0 : i32
    %c0_i32_0 = arith.constant 0 : i32
    return %c0_i32, %arg0 : i32, i32
  }
}

module attributes {stable_mosaic.version = 11 : i64} {
  func.func @vq_argmin_kernel(%arg0: i32, %arg1: memref<256x16xf32, #tpu.memory_space<vmem>>, %arg2: memref<16x32xf32, #tpu.memory_space<vmem>>, %arg3: memref<1x32xf32, #tpu.memory_space<vmem>>, %arg4: memref<32x1024xbf16, #tpu.memory_space<vmem>>, %arg5: memref<1x1024xf32, #tpu.memory_space<vmem>>, %arg6: memref<256x1xi32, #tpu.memory_space<vmem>>) attributes {dimension_semantics = [#tpu.dimension_semantics<parallel>], iteration_bounds = array<i64: 2>, scalar_prefetch = 0 : i64, scratch_operands = 0 : i64, tpu.core_type = #tpu.core_type<tc>, window_params = [{transform_indices = @transform_0, window_bounds = array<i64: 256, 16>}, {pipeline_mode = #tpu.pipeline_mode<synchronous>, transform_indices = @transform_1, window_bounds = array<i64: 16, 32>}, {pipeline_mode = #tpu.pipeline_mode<synchronous>, transform_indices = @transform_2, window_bounds = array<i64: 1, 32>}, {pipeline_mode = #tpu.pipeline_mode<synchronous>, transform_indices = @transform_3, window_bounds = array<i64: 32, 1024>}, {pipeline_mode = #tpu.pipeline_mode<synchronous>, transform_indices = @transform_4, window_bounds = array<i64: 1, 1024>}, {transform_indices = @transform_5, window_bounds = array<i64: 256, 1>}]} {
    %c0 = arith.constant 0 : index
    %c0_0 = arith.constant 0 : index
    %0 = vector.load %arg1[%c0, %c0_0] : memref<256x16xf32, #tpu.memory_space<vmem>>, vector<256x16xf32>
    %c0_1 = arith.constant 0 : index
    %c0_2 = arith.constant 0 : index
    %1 = vector.load %arg2[%c0_1, %c0_2] : memref<16x32xf32, #tpu.memory_space<vmem>>, vector<16x32xf32>
    %cst = arith.constant dense<0.000000e+00> : vector<256x32xf32>
    %2 = tpu.matmul %0, %1, %cst {dimension_numbers = #tpu.dot_dimension_numbers<[1], [0], [0], [1], [0, 0, 1, 1], [], []>} : vector<256x16xf32>, vector<16x32xf32>, vector<256x32xf32> -> vector<256x32xf32>
    %c0_3 = arith.constant 0 : index
    %c0_4 = arith.constant 0 : index
    %3 = vector.load %arg3[%c0_3, %c0_4] : memref<1x32xf32, #tpu.memory_space<vmem>>, vector<1x32xf32>
    %4 = vector.broadcast %3 : vector<1x32xf32> to vector<256x32xf32>
    %5 = arith.addf %2, %4 : vector<256x32xf32>
    %cst_5 = arith.constant -2.000000e+00 : f32
    %6 = vector.broadcast %cst_5 : f32 to vector<256x32xf32>
    %7 = arith.mulf %6, %5 : vector<256x32xf32>
    %8 = arith.truncf %7 : vector<256x32xf32> to vector<256x32xbf16>
    %9 = tpu.iota {dimensions = array<i32: 1>} : vector<256x256xi32>
    %cst_6 = arith.constant 0x7F800000 : f32
    %10 = vector.broadcast %cst_6 : f32 to vector<256x1xf32>
    %c0_i32 = arith.constant 0 : i32
    %11 = vector.broadcast %c0_i32 : i32 to vector<256x1xi32>
    %c0_i32_7 = arith.constant 0 : i32
    %c4_i32 = arith.constant 4 : i32
    %12 = arith.addi %c0_i32_7, %c4_i32 : i32
    %c1_i32 = arith.constant 1 : i32
    %13:2 = scf.for %arg7 = %c0_i32_7 to %12 step %c1_i32 iter_args(%arg8 = %10, %arg9 = %11) -> (vector<256x1xf32>, vector<256x1xi32>)  : i32 {
      %c256_i32 = arith.constant 256 : i32
      %15 = arith.muli %arg7, %c256_i32 : i32
      %16 = tpu.assume_multiple %15, 128 : i32
      %c0_11 = arith.constant 0 : index
      %17 = arith.index_cast %16 : i32 to index
      %18 = vector.load %arg4[%c0_11, %17] : memref<32x1024xbf16, #tpu.memory_space<vmem>>, vector<32x256xbf16>
      %c0_12 = arith.constant 0 : index
      %19 = arith.index_cast %16 : i32 to index
      %20 = vector.load %arg5[%c0_12, %19] : memref<1x1024xf32, #tpu.memory_space<vmem>>, vector<1x256xf32>
      %cst_13 = arith.constant dense<0.000000e+00> : vector<256x256xf32>
      %21 = tpu.matmul %8, %18, %cst_13 {dimension_numbers = #tpu.dot_dimension_numbers<[1], [0], [0], [1], [0, 0, 1, 1], [], []>} : vector<256x32xbf16>, vector<32x256xbf16>, vector<256x256xf32> -> vector<256x256xf32>
      %22 = vector.broadcast %20 : vector<1x256xf32> to vector<256x256xf32>
      %23 = arith.addf %21, %22 : vector<256x256xf32>
      %cst_14 = arith.constant dense<0x7F800000> : vector<256xf32>
      %24 = vector.multi_reduction <minimumf>, %23, %cst_14 [1] : vector<256x256xf32> to vector<256xf32>
      %25 = vector.shape_cast %24 : vector<256xf32> to vector<256x1xf32>
      %26 = vector.broadcast %25 : vector<256x1xf32> to vector<256x256xf32>
      %27 = arith.cmpf oeq, %23, %26 : vector<256x256xf32>
      %c256_i32_15 = arith.constant 256 : i32
      %28 = vector.broadcast %c256_i32_15 : i32 to vector<256x256xi32>
      %29 = arith.select %27, %9, %28 : vector<256x256xi1>, vector<256x256xi32>
      %cst_16 = arith.constant dense<2147483647> : vector<256xi32>
      %30 = vector.multi_reduction <minsi>, %29, %cst_16 [1] : vector<256x256xi32> to vector<256xi32>
      %31 = vector.shape_cast %30 : vector<256xi32> to vector<256x1xi32>
      %32 = arith.cmpf olt, %25, %arg8 : vector<256x1xf32>
      %c256_i32_17 = arith.constant 256 : i32
      %33 = arith.muli %arg7, %c256_i32_17 : i32
      %34 = vector.broadcast %33 : i32 to vector<256x1xi32>
      %35 = arith.addi %31, %34 : vector<256x1xi32>
      %36 = arith.select %32, %35, %arg9 : vector<256x1xi1>, vector<256x1xi32>
      %37 = arith.minimumf %arg8, %25 : vector<256x1xf32>
      scf.yield %37, %36 : vector<256x1xf32>, vector<256x1xi32>
    }
    %c4_i32_8 = arith.constant 4 : i32
    %c0_9 = arith.constant 0 : index
    %c0_10 = arith.constant 0 : index
    %14 = vector.load %arg6[%c0_9, %c0_10] : memref<256x1xi32, #tpu.memory_space<vmem>>, vector<256x1xi32>
    tpu.vector_store %arg6[%c0_9, %c0_10], %13#1 {strides = array<i32>} : memref<256x1xi32, #tpu.memory_space<vmem>>, vector<256x1xi32>,
    return
  }
  func.func @transform_0(%arg0: i32) -> (i32, i32) {
    %c0_i32 = arith.constant 0 : i32
    %c0_i32_0 = arith.constant 0 : i32
    return %arg0, %c0_i32 : i32, i32
  }
  func.func @transform_1(%arg0: i32) -> (i32, i32) {
    %c0_i32 = arith.constant 0 : i32
    %c0_i32_0 = arith.constant 0 : i32
    %c0_i32_1 = arith.constant 0 : i32
    return %c0_i32, %c0_i32_0 : i32, i32
  }
  func.func @transform_2(%arg0: i32) -> (i32, i32) {
    %c0_i32 = arith.constant 0 : i32
    %c0_i32_0 = arith.constant 0 : i32
    %c0_i32_1 = arith.constant 0 : i32
    return %c0_i32, %c0_i32_0 : i32, i32
  }
  func.func @transform_3(%arg0: i32) -> (i32, i32) {
    %c0_i32 = arith.constant 0 : i32
    %c0_i32_0 = arith.constant 0 : i32
    %c0_i32_1 = arith.constant 0 : i32
    return %c0_i32, %c0_i32_0 : i32, i32
  }
  func.func @transform_4(%arg0: i32) -> (i32, i32) {
    %c0_i32 = arith.constant 0 : i32
    %c0_i32_0 = arith.constant 0 : i32
    %c0_i32_1 = arith.constant 0 : i32
    return %c0_i32, %c0_i32_0 : i32, i32
  }
  func.func @transform_5(%arg0: i32) -> (i32, i32) {
    %c0_i32 = arith.constant 0 : i32
    %c0_i32_0 = arith.constant 0 : i32
    return %arg0, %c0_i32 : i32, i32
  }
}

</mosaic_0001>

<llo_original>
// kernel: vq_forward.2
$region0: #{vq_forward.2}
  #allocation0 [shape = 'u32[]', space=smem, size = 0x4, offset = 0x4, fixed_abs, tag = 'smem constant byte address 0x4 - core index']
  #allocation1 [shape = 'u32[72,128]{1,0:T(1,128)}', space=vmem, size = 0x9000, scoped, tag = 'internal scratch']
  %s0 = inlined_call_operand.vmem [shape: f32[1024,32], index: 0, kind: input, shape index: {}]
  %s1 = inlined_call_operand.vmem [shape: f32[32,32], index: 1, kind: input, shape index: {}]
  %s2 = inlined_call_operand.vmem [shape: f32[1,32], index: 2, kind: input, shape index: {}]
  %s3 = inlined_call_operand.vmem [shape: f32[32,1], index: 3, kind: input, shape index: {}]
  %s4 = inlined_call_operand.vmem [shape: f32[1024,32], index: 4, kind: output, shape index: {0}]
  %s5 = inlined_call_operand.vmem [shape: bf16[32,1024], index: 5, kind: output, shape index: {1}]
  %s6 = inlined_call_operand.vmem [shape: f32[1,1024], index: 6, kind: output, shape index: {2}]
  %7 = xla_tuple %s4, %s5, %s6
  %s8 = sld [smem:[#allocation0]]
  $region99: #{vq_forward.2} parent=0
    _
  %s10 = ssub.s32 1, %s8
  %s11 = scalar_select 0, %s10, %s8
  $region1: #{vq_forward.2} parent=0
    #allocation2 [shape = 'u8[32768]{0}', space=vmem, size = 0x8000, scoped, tag = 'output window, operand 1']
    loop: start=0, step=1, limit=6
    $region2: #{vq_forward.2} parent=1 // loop_pre_header
      _
    $region3: #{vq_forward.2} parent=1 // loop_header
      %s13 = sphi 0, %s17
      %p14 = scmp.ge.s32.totalorder %s13, 6
      %s23 = sphi 0, %s25
      %s26 = sphi 0, %s23
      %s27 = sphi 0, %s26
      %s43 = sphi 0, %s27
      %s47 = sphi 0, %s47
      %s49 = sphi 0, %s47
      %s50 = sphi 0, %s49
      %s64 = sphi 0, %s50
      %s68 = sphi 0, %s68
      %s70 = sphi 0, %s68
      %s71 = sphi 0, %s70
      %s85 = sphi 0, %s71
      %s89 = sphi 0, %s89
      %s91 = sphi 0, %s89
      %s92 = sphi 0, %s91
      %s106 = sphi 0, %s92
      %s112 = sphi 0, %s114
      %s115 = sphi 0, %s112
      %s116 = sphi 0, %s115
      %s132 = sphi 0, %s116
      %s138 = sphi 0, %s140
      %s141 = sphi 0, %s138
      %s142 = sphi 0, %s141
      %s158 = sphi 0, %s142
      %s164 = sphi 0, %s166
      %s167 = sphi 0, %s164
      %s168 = sphi 0, %s167
      %s184 = sphi 0, %s168
    $region4: #{vq_forward.2} parent=1 // loop_header_branch
      %16 = sbr.rel (%p14) target = $region8
    $region5: #{vq_forward.2} parent=1 // loop_body
      %s18 = ssub.s32 %s13, 1
      %s19 = ssub.s32 %s13, 2
      %s20 = sadd.s32 %s13, 1
      %s21 = ssub.s32 %s13, %s20
      %p22 = scmp.eq.s32.totalorder %s21, 0
      %s24 = sadd.s32 %s23, 1
      %s25 = scalar_select %p22, %s23, %s24
      %p28 = pneg %p22
      %p29 = scmp.eq.s32.totalorder %s13, 3
      %p30 = por %p28, %p29
      %p31 = scmp.ne.s32.totalorder %s23, %s26
      %p32 = scmp.eq.s32.totalorder %s13, 0
      %p33 = por %p31, %p32
      %p34 = scmp.ne.s32.totalorder %s23, %s26
      %p35 = scmp.eq.s32.totalorder %s18, 3
      %p36 = por %p34, %p35
      %p37 = scmp.ne.s32.totalorder %s26, %s27
      %p38 = scmp.eq.s32.totalorder %s18, 0
      %p39 = por %p37, %p38
      %p40 = scmp.ne.s32.totalorder %s26, %s27
      %p41 = scmp.eq.s32.totalorder %s19, 3
      %p42 = por %p40, %p41
      %p44 = scmp.ne.s32.totalorder %s27, %s43
      %p45 = scmp.eq.s32.totalorder %s19, 0
      %p46 = por %p44, %p45
      %s48 = sadd.s32 %s47, 1
      %p51 = scmp.eq.s32.totalorder %s13, 3
      %p52 = scmp.ne.s32.totalorder %s47, %s49
      %p53 = scmp.eq.s32.totalorder %s13, 0
      %p54 = por %p52, %p53
      %p55 = scmp.ne.s32.totalorder %s47, %s49
      %p56 = scmp.eq.s32.totalorder %s18, 3
      %p57 = por %p55, %p56
      %p58 = scmp.ne.s32.totalorder %s49, %s50
      %p59 = scmp.eq.s32.totalorder %s18, 0
      %p60 = por %p58, %p59
      %p61 = scmp.ne.s32.totalorder %s49, %s50
      %p62 = scmp.eq.s32.totalorder %s19, 3
      %p63 = por %p61, %p62
      %p65 = scmp.ne.s32.totalorder %s50, %s64
      %p66 = scmp.eq.s32.totalorder %s19, 0
      %p67 = por %p65, %p66
      %s69 = sadd.s32 %s68, 1
      %p72 = scmp.eq.s32.totalorder %s13, 3
      %p73 = scmp.ne.s32.totalorder %s68, %s70
      %p74 = scmp.eq.s32.totalorder %s13, 0
      %p75 = por %p73, %p74
      %p76 = scmp.ne.s32.totalorder %s68, %s70
      %p77 = scmp.eq.s32.totalorder %s18, 3
      %p78 = por %p76, %p77
      %p79 = scmp.ne.s32.totalorder %s70, %s71
      %p80 = scmp.eq.s32.totalorder %s18, 0
      %p81 = por %p79, %p80
      %p82 = scmp.ne.s32.totalorder %s70, %s71
      %p83 = scmp.eq.s32.totalorder %s19, 3
      %p84 = por %p82, %p83
      %p86 = scmp.ne.s32.totalorder %s71, %s85
      %p87 = scmp.eq.s32.totalorder %s19, 0
      %p88 = por %p86, %p87
      %s90 = sadd.s32 %s89, 1
      %p93 = scmp.eq.s32.totalorder %s13, 3
      %p94 = scmp.ne.s32.totalorder %s89, %s91
      %p95 = scmp.eq.s32.totalorder %s13, 0
      %p96 = por %p94, %p95
      %p97 = scmp.ne.s32.totalorder %s89, %s91
      %p98 = scmp.eq.s32.totalorder %s18, 3
      %p99 = por %p97, %p98
      %p100 = scmp.ne.s32.totalorder %s91, %s92
      %p101 = scmp.eq.s32.totalorder %s18, 0
      %p102 = por %p100, %p101
      %p103 = scmp.ne.s32.totalorder %s91, %s92
      %p104 = scmp.eq.s32.totalorder %s19, 3
      %p105 = por %p103, %p104
      %p107 = scmp.ne.s32.totalorder %s92, %s106
      %p108 = scmp.eq.s32.totalorder %s19, 0
      %p109 = por %p107, %p108
      %s110 = ssub.s32 %s13, %s20
      %p111 = scmp.eq.s32.totalorder %s110, 0
      %s113 = sadd.s32 %s112, 1
      %s114 = scalar_select %p111, %s112, %s113
      %p117 = pneg %p111
      %p118 = scmp.eq.s32.totalorder %s13, 3
      %p119 = por %p117, %p118
      %p120 = scmp.ne.s32.totalorder %s112, %s115
      %p121 = scmp.eq.s32.totalorder %s13, 0
      %p122 = por %p120, %p121
      %p123 = scmp.ne.s32.totalorder %s112, %s115
      %p124 = scmp.eq.s32.totalorder %s18, 3
      %p125 = por %p123, %p124
      %p126 = scmp.ne.s32.totalorder %s115, %s116
      %p127 = scmp.eq.s32.totalorder %s18, 0
      %p128 = por %p126, %p127
      %p129 = scmp.ne.s32.totalorder %s115, %s116
      %p130 = scmp.eq.s32.totalorder %s19, 3
      %p131 = por %p129, %p130
      %p133 = scmp.ne.s32.totalorder %s116, %s132
      %p134 = scmp.eq.s32.totalorder %s19, 0
      %p135 = por %p133, %p134
      %s136 = ssub.s32 %s13, %s20
      %p137 = scmp.eq.s32.totalorder %s136, 0
      %s139 = sadd.s32 %s138, 1
      %s140 = scalar_select %p137, %s138, %s139
      %p143 = pneg %p137
      %p144 = scmp.eq.s32.totalorder %s13, 3
      %p145 = por %p143, %p144
      %p146 = scmp.ne.s32.totalorder %s138, %s141
      %p147 = scmp.eq.s32.totalorder %s13, 0
      %p148 = por %p146, %p147
      %p149 = scmp.ne.s32.totalorder %s138, %s141
      %p150 = scmp.eq.s32.totalorder %s18, 3
      %p151 = por %p149, %p150
      %p152 = scmp.ne.s32.totalorder %s141, %s142
      %p153 = scmp.eq.s32.totalorder %s18, 0
      %p154 = por %p152, %p153
      %p155 = scmp.ne.s32.totalorder %s141, %s142
      %p156 = scmp.eq.s32.totalorder %s19, 3
      %p157 = por %p155, %p156
      %p159 = scmp.ne.s32.totalorder %s142, %s158
      %p160 = scmp.eq.s32.totalorder %s19, 0
      %p161 = por %p159, %p160
      %s162 = ssub.s32 %s13, %s20
      %p163 = scmp.eq.s32.totalorder %s162, 0
      %s165 = sadd.s32 %s164, 1
      %s166 = scalar_select %p163, %s164, %s165
      %p169 = pneg %p163
      %p170 = scmp.eq.s32.totalorder %s13, 3
      %p171 = por %p169, %p170
      %p172 = scmp.ne.s32.totalorder %s164, %s167
      %p173 = scmp.eq.s32.totalorder %s13, 0
      %p174 = por %p172, %p173
      %p175 = scmp.ne.s32.totalorder %s164, %s167
      %p176 = scmp.eq.s32.totalorder %s18, 3
      %p177 = por %p175, %p176
      %p178 = scmp.ne.s32.totalorder %s167, %s168
      %p179 = scmp.eq.s32.totalorder %s18, 0
      %p180 = por %p178, %p179
      %p181 = scmp.ne.s32.totalorder %s167, %s168
      %p182 = scmp.eq.s32.totalorder %s19, 3
      %p183 = por %p181, %p182
      %p185 = scmp.ne.s32.totalorder %s168, %s184
      %p186 = scmp.eq.s32.totalorder %s19, 0
      %p187 = por %p185, %p186
      %p188 = scmp.le.s32.totalorder 1, %s13
      %p189 = scmp.lt.s32.totalorder %s13, 5
      %p190 = pnand %p188, %p189
      %p191 = pneg %p190
      // Predicated region
      $region9: #{vq_forward.2} parent=5 // pred_check
        _
      $region10: #{vq_forward.2} parent=5 // pred_check_branch
        %193 = sbr.rel (%p190) target = $region12
      $region11: #{vq_forward.2} parent=5 // pred_region
        %s194 = ssub.s32 %s13, 1
        // Predicated region
        $region13: #{vq_forward.2} parent=11 // pred_check
          %p195 = pneg %p60
        $region14: #{vq_forward.2} parent=11 // pred_check_branch
          %197 = sbr.rel (%p195) target = $region16
        $region15: #{vq_forward.2} parent=11 // pred_region
          _
        $region16: #{vq_forward.2} parent=11 // pred_fallthru
          _
        // Predicated region
        $region17: #{vq_forward.2} parent=11 // pred_check
          %p198 = pneg %p81
        $region18: #{vq_forward.2} parent=11 // pred_check_branch
          %200 = sbr.rel (%p198) target = $region20
        $region19: #{vq_forward.2} parent=11 // pred_region
          _
        $region20: #{vq_forward.2} parent=11 // pred_fallthru
          _
        // Predicated region
        $region21: #{vq_forward.2} parent=11 // pred_check
          %p201 = pneg %p102
        $region22: #{vq_forward.2} parent=11 // pred_check_branch
          %203 = sbr.rel (%p201) target = $region24
        $region23: #{vq_forward.2} parent=11 // pred_region
          _
        $region24: #{vq_forward.2} parent=11 // pred_fallthru
          _
      $region12: #{vq_forward.2} parent=5 // pred_fallthru
        _
      %p204 = scmp.lt.s32.totalorder %s13, 4
      // Predicated region
      $region25: #{vq_forward.2} parent=5 // pred_check
        %p205 = pneg %p204
      $region26: #{vq_forward.2} parent=5 // pred_check_branch
        %207 = sbr.rel (%p205) target = $region28
      $region27: #{vq_forward.2} parent=5 // pred_region
        // Predicated region
        $region29: #{vq_forward.2} parent=27 // pred_check
          %p208 = pneg %p33
        $region30: #{vq_forward.2} parent=27 // pred_check_branch
          %210 = sbr.rel (%p208) target = $region32
        $region31: #{vq_forward.2} parent=27 // pred_region
          %s211 = smul.u32 32, %s13
          %p212 = scmp.lt.s32.totalorder %s211, 127
          %s213 = scalar_select %p212, %s211, 127
          %s214 = smul.addr %s213, 8
          %s215 = scalar_lea.vmem %s0, %s214
          %s216 = smul.u32 32, %s13
        $region32: #{vq_forward.2} parent=27 // pred_fallthru
          _
      $region28: #{vq_forward.2} parent=5 // pred_fallthru
        _
      %p217 = scmp.le.s32.totalorder 1, %s13
      %p218 = scmp.lt.s32.totalorder %s13, 5
      %p219 = pnand %p217, %p218
      %p220 = pneg %p219
      // Predicated region
      $region33: #{vq_forward.2} parent=5 // pred_check
        _
      $region34: #{vq_forward.2} parent=5 // pred_check_branch
        %222 = sbr.rel (%p219) target = $region36
      $region35: #{vq_forward.2} parent=5 // pred_region
        %s223 = ssub.s32 %s13, 1
        %s224 = smul.u32 32, %s18
        %p225 = scmp.lt.s32.totalorder %s224, 127
        %s226 = scalar_select %p225, %s224, 127
        %s227 = smul.addr %s226, 8
        %s228 = scalar_lea.vmem %s0, %s227
        %p229 = pneg %p39
        %p230 = pneg %p36
        %p231 = pneg %p60
        %p232 = pneg %p57
        %p233 = pneg %p81
        %p234 = pneg %p78
        %p235 = pneg %p102
        %p236 = pneg %p99
        %p237 = pneg %p128
        %p238 = pneg %p125
        %s239 = smul.u32 32, %s18
        %p240 = scmp.lt.s32.totalorder %s239, 127
        %s241 = scalar_select %p240, %s239, 127
        %s242 = smul.addr %s241, 8
        %s243 = scalar_lea.vmem %s4, %s242
        %p244 = pneg %p154
        %p245 = pneg %p151
        %s246 = sand.u32 %s141, 1
        %s247 = sand.u32 %s141, 1
        %s248 = smul.addr %s247, 32
        %s249 = scalar_lea.vmem [#allocation2], %s248
        %p250 = pneg %p180
        %p251 = pneg %p177
        %s252 = smul.u32 2, %s18
        %p253 = scmp.lt.s32.totalorder %s252, 7
        %s254 = scalar_select %p253, %s252, 7
        %s255 = scalar_lea.vmem %s6, %s254
        %s256 = smul.u32 32, %s18
        %p257 = scmp.lt.s32.totalorder %s256, 127
        %s258 = scalar_select %p257, %s256, 127
        %s259 = smul.addr %s258, 8
        %s260 = scalar_lea.vmem %s0, %s259
        %s261 = smul.u32 32, %s18
        %s262 = smul.u32 32, %s18
        %p263 = scmp.lt.s32.totalorder %s262, 127
        %s264 = scalar_select %p263, %s262, 127
        %s265 = smul.addr %s264, 8
        %s266 = scalar_lea.vmem %s4, %s265
        %s267 = smul.u32 32, %s18
        %s268 = smul.u32 2, %s18
        %s269 = smul.u32 2, %s18
        %p270 = scmp.lt.s32.totalorder %s269, 7
        %s271 = scalar_select %p270, %s269, 7
        %s272 = scalar_lea.vmem %s6, %s271
        %s273 = smul.u32 2, %s18
        %v274 = vld [vmem:[%s260] sm:$0xff]
        %v275 = vld [vmem:[%s260 + $0x8] sm:$0xff]
        %v276 = vld [vmem:[%s260 + $0x10] sm:$0xff]
        %v277 = vld [vmem:[%s260 + $0x18] sm:$0xff]
        %v278 = vld [vmem:[%s260 + $0x20] sm:$0xff]
        %v279 = vld [vmem:[%s260 + $0x28] sm:$0xff]
        %v280 = vld [vmem:[%s260 + $0x30] sm:$0xff]
        %v281 = vld [vmem:[%s260 + $0x38] sm:$0xff]
        %v282 = vld [vmem:[%s260 + $0x40] sm:$0xff]
        %v283 = vld [vmem:[%s260 + $0x48] sm:$0xff]
        %v284 = vld [vmem:[%s260 + $0x50] sm:$0xff]
        %v285 = vld [vmem:[%s260 + $0x58] sm:$0xff]
        %v286 = vld [vmem:[%s260 + $0x60] sm:$0xff]
        %v287 = vld [vmem:[%s260 + $0x68] sm:$0xff]
        %v288 = vld [vmem:[%s260 + $0x70] sm:$0xff]
        %v289 = vld [vmem:[%s260 + $0x78] sm:$0xff]
        %v290 = vld [vmem:[%s260 + $0x80] sm:$0xff]
        %v291 = vld [vmem:[%s260 + $0x88] sm:$0xff]
        %v292 = vld [vmem:[%s260 + $0x90] sm:$0xff]
        %v293 = vld [vmem:[%s260 + $0x98] sm:$0xff]
        %v294 = vld [vmem:[%s260 + $0xa0] sm:$0xff]
        %v295 = vld [vmem:[%s260 + $0xa8] sm:$0xff]
        %v296 = vld [vmem:[%s260 + $0xb0] sm:$0xff]
        %v297 = vld [vmem:[%s260 + $0xb8] sm:$0xff]
        %v298 = vld [vmem:[%s260 + $0xc0] sm:$0xff]
        %v299 = vld [vmem:[%s260 + $0xc8] sm:$0xff]
        %v300 = vld [vmem:[%s260 + $0xd0] sm:$0xff]
        %v301 = vld [vmem:[%s260 + $0xd8] sm:$0xff]
        %v302 = vld [vmem:[%s260 + $0xe0] sm:$0xff]
        %v303 = vld [vmem:[%s260 + $0xe8] sm:$0xff]
        %v304 = vld [vmem:[%s260 + $0xf0] sm:$0xff]
        %v305 = vld [vmem:[%s260 + $0xf8] sm:$0xff]
        %v306 = vld [vmem:[%s1] sm:$0xff]
        %v307 = vld [vmem:[%s1 + $0x8] sm:$0xff]
        %v308 = vld [vmem:[%s1 + $0x10] sm:$0xff]
        %v309 = vld [vmem:[%s1 + $0x18] sm:$0xff]
        %v310 = vld [vmem:[%s2] sm:$0x1]
        %v312 = vperm.slane %v310, 0
        %vm314 = vcmask 261120
        %v316 = vsel %vm314, %v274, 0
        %v319 = vsel %vm314, %v275, 0
        %v322 = vsel %vm314, %v276, 0
        %v325 = vsel %vm314, %v277, 0
        %v328 = vsel %vm314, %v278, 0
        %v331 = vsel %vm314, %v279, 0
        %v334 = vsel %vm314, %v280, 0
        %v337 = vsel %vm314, %v281, 0
        %v340 = vsel %vm314, %v282, 0
        %v343 = vsel %vm314, %v283, 0
        %v346 = vsel %vm314, %v284, 0
        %v349 = vsel %vm314, %v285, 0
        %v352 = vsel %vm314, %v286, 0
        %v355 = vsel %vm314, %v287, 0
        %v358 = vsel %vm314, %v288, 0
        %v361 = vsel %vm314, %v289, 0
        %v364 = vsel %vm314, %v290, 0
        %v367 = vsel %vm314, %v291, 0
        %v370 = vsel %vm314, %v292, 0
        %v373 = vsel %vm314, %v293, 0
        %v376 = vsel %vm314, %v294, 0
        %v379 = vsel %vm314, %v295, 0
        %v382 = vsel %vm314, %v296, 0
        %v385 = vsel %vm314, %v297, 0
        %v388 = vsel %vm314, %v298, 0
        %v391 = vsel %vm314, %v299, 0
        %v394 = vsel %vm314, %v300, 0
        %v397 = vsel %vm314, %v301, 0
        %v400 = vsel %vm314, %v302, 0
        %v403 = vsel %vm314, %v303, 0
        %v406 = vsel %vm314, %v304, 0
        %v409 = vsel %vm314, %v305, 0
        %v412 = vsel %vm314, %v306, 0
        %v415 = vsel %vm314, %v307, 0
        %v418 = vsel %vm314, %v308, 0
        %v421 = vsel %vm314, %v309, 0
        %423 = vmatpush.xpose.msra.mxu0 0.0
        %424 = vmatpush.xpose.msra.mxu0 0.0
        %425 = vmatpush.xpose.msra.mxu0 0.0
        %426 = vmatpush.xpose.msra.mxu0 0.0
        %427 = vmatpush.xpose.msra.mxu0 0.0
        %428 = vmatpush.xpose.msra.mxu0 0.0
        %429 = vmatpush.xpose.msra.mxu0 0.0
        %430 = vmatpush.xpose.msra.mxu0 0.0
        %431 = vmatpush.xpose.msra.mxu0 0.0
        %432 = vmatpush.xpose.msra.mxu0 0.0
        %433 = vmatpush.xpose.msra.mxu0 0.0
        %434 = vmatpush.xpose.msra.mxu0 0.0
        %435 = vmatpush.xpose.msra.mxu0 %v421
        %436 = vmatpush.xpose.msra.mxu0 %v418
        %437 = vmatpush.xpose.msra.mxu0 %v415
        %438 = vmatpush.xpose.msra.mxu0 %v412
        %439 = vmatmul.f32.gmra.mxu0 %v316
        %v440 = vpop.f32.mrf.mxu0
        %v441 = vadd.f32 %v312, %v440
        %442 = vmatmul.f32.gmra.mxu0 %v319
        %v443 = vpop.f32.mrf.mxu0
        %v444 = vadd.f32 %v312, %v443
        %445 = vmatmul.f32.gmra.mxu0 %v322
        %v446 = vpop.f32.mrf.mxu0
        %v447 = vadd.f32 %v312, %v446
        %448 = vmatmul.f32.gmra.mxu0 %v325
        %v449 = vpop.f32.mrf.mxu0
        %v450 = vadd.f32 %v312, %v449
        %451 = vmatmul.f32.gmra.mxu0 %v328
        %v452 = vpop.f32.mrf.mxu0
        %v453 = vadd.f32 %v312, %v452
        %454 = vmatmul.f32.gmra.mxu0 %v331
        %v455 = vpop.f32.mrf.mxu0
        %v456 = vadd.f32 %v312, %v455
        %457 = vmatmul.f32.gmra.mxu0 %v334
        %v458 = vpop.f32.mrf.mxu0
        %v459 = vadd.f32 %v312, %v458
        %460 = vmatmul.f32.gmra.mxu0 %v337
        %v461 = vpop.f32.mrf.mxu0
        %v462 = vadd.f32 %v312, %v461
        %463 = vmatmul.f32.gmra.mxu0 %v340
        %v464 = vpop.f32.mrf.mxu0
        %v465 = vadd.f32 %v312, %v464
        %466 = vmatmul.f32.gmra.mxu0 %v343
        %v467 = vpop.f32.mrf.mxu0
        %v468 = vadd.f32 %v312, %v467
        %469 = vmatmul.f32.gmra.mxu0 %v346
        %v470 = vpop.f32.mrf.mxu0
        %v471 = vadd.f32 %v312, %v470
        %472 = vmatmul.f32.gmra.mxu0 %v349
        %v473 = vpop.f32.mrf.mxu0
        %v474 = vadd.f32 %v312, %v473
        %475 = vmatmul.f32.gmra.mxu0 %v352
        %v476 = vpop.f32.mrf.mxu0
        %v477 = vadd.f32 %v312, %v476
        %478 = vmatmul.f32.gmra.mxu0 %v355
        %v479 = vpop.f32.mrf.mxu0
        %v480 = vadd.f32 %v312, %v479
        %481 = vmatmul.f32.gmra.mxu0 %v358
        %v482 = vpop.f32.mrf.mxu0
        %v483 = vadd.f32 %v312, %v482
        %484 = vmatmul.f32.gmra.mxu0 %v361
        %v485 = vpop.f32.mrf.mxu0
        %v486 = vadd.f32 %v312, %v485
        %487 = vmatmul.f32.gmra.mxu0 %v364
        %v488 = vpop.f32.mrf.mxu0
        %v489 = vadd.f32 %v312, %v488
        %490 = vmatmul.f32.gmra.mxu0 %v367
        %v491 = vpop.f32.mrf.mxu0
        %v492 = vadd.f32 %v312, %v491
        %493 = vmatmul.f32.gmra.mxu0 %v370
        %v494 = vpop.f32.mrf.mxu0
        %v495 = vadd.f32 %v312, %v494
        %496 = vmatmul.f32.gmra.mxu0 %v373
        %v497 = vpop.f32.mrf.mxu0
        %v498 = vadd.f32 %v312, %v497
        %499 = vmatmul.f32.gmra.mxu0 %v376
        %v500 = vpop.f32.mrf.mxu0
        %v501 = vadd.f32 %v312, %v500
        %502 = vmatmul.f32.gmra.mxu0 %v379
        %v503 = vpop.f32.mrf.mxu0
        %v504 = vadd.f32 %v312, %v503
        %505 = vmatmul.f32.gmra.mxu0 %v382
        %v506 = vpop.f32.mrf.mxu0
        %v507 = vadd.f32 %v312, %v506
        %508 = vmatmul.f32.gmra.mxu0 %v385
        %v509 = vpop.f32.mrf.mxu0
        %v510 = vadd.f32 %v312, %v509
        %511 = vmatmul.f32.gmra.mxu0 %v388
        %v512 = vpop.f32.mrf.mxu0
        %v513 = vadd.f32 %v312, %v512
        %514 = vmatmul.f32.gmra.mxu0 %v391
        %v515 = vpop.f32.mrf.mxu0
        %v516 = vadd.f32 %v312, %v515
        %517 = vmatmul.f32.gmra.mxu0 %v394
        %v518 = vpop.f32.mrf.mxu0
        %v519 = vadd.f32 %v312, %v518
        %520 = vmatmul.f32.gmra.mxu0 %v397
        %v521 = vpop.f32.mrf.mxu0
        %v522 = vadd.f32 %v312, %v521
        %523 = vmatmul.f32.gmra.mxu0 %v400
        %v524 = vpop.f32.mrf.mxu0
        %v525 = vadd.f32 %v312, %v524
        %526 = vmatmul.f32.gmra.mxu0 %v403
        %v527 = vpop.f32.mrf.mxu0
        %v528 = vadd.f32 %v312, %v527
        %529 = vmatmul.f32.gmra.mxu0 %v406
        %v530 = vpop.f32.mrf.mxu0
        %v531 = vadd.f32 %v312, %v530
        %532 = vmatmul.f32.gmra.mxu0 %v409
        %v533 = vpop.f32.mrf.mxu0
        %v534 = vadd.f32 %v312, %v533
        %535 = vdwg.mxu0
        %v536 = vld [vmem:[%s3] sm:$0xff]
        %v537 = vld [vmem:[%s3 + $0x8] sm:$0xff]
        %v538 = vld [vmem:[%s3 + $0x10] sm:$0xff]
        %v539 = vld [vmem:[%s3 + $0x18] sm:$0xff]
        %541 = vset.pattern.permute.xlu0 0
        %542 = vperm.xlu0 %541, %v536
        %v543 = vpop.permute.xlu0 %542
        %546 = vset.pattern.permute.xlu0 0
        %547 = vperm.xlu0 %546, %v537
        %v548 = vpop.permute.xlu0 %547
        %551 = vset.pattern.permute.xlu0 0
        %552 = vperm.xlu0 %551, %v538
        %v553 = vpop.permute.xlu0 %552
        %556 = vset.pattern.permute.xlu0 0
        %557 = vperm.xlu0 %556, %v539
        %v558 = vpop.permute.xlu0 %557
        %560 = vmatpush.xpose.msra.mxu0 %v361
        %561 = vmatpush.xpose.msra.mxu0 %v358
        %562 = vmatpush.xpose.msra.mxu0 %v355
        %563 = vmatpush.xpose.msra.mxu0 %v352
        %564 = vmatpush.xpose.msra.mxu0 %v349
        %565 = vmatpush.xpose.msra.mxu0 %v346
        %566 = vmatpush.xpose.msra.mxu0 %v343
        %567 = vmatpush.xpose.msra.mxu0 %v340
        %568 = vmatpush.xpose.msra.mxu0 %v337
        %569 = vmatpush.xpose.msra.mxu0 %v334
        %570 = vmatpush.xpose.msra.mxu0 %v331
        %571 = vmatpush.xpose.msra.mxu0 %v328
        %572 = vmatpush.xpose.msra.mxu0 %v325
        %573 = vmatpush.xpose.msra.mxu0 %v322
        %574 = vmatpush.xpose.msra.mxu0 %v319
        %575 = vmatpush.xpose.msra.mxu0 %v316
        %576 = vmatmul.f32.gmra.mxu0 %v412
        %v577 = vpop.f32.mrf.mxu0
        %v578 = vadd.f32 %v543, %v577
        %579 = vmatmul.f32.gmra.mxu0 %v415
        %v580 = vpop.f32.mrf.mxu0
        %v581 = vadd.f32 %v548, %v580
        %582 = vmatmul.f32.gmra.mxu0 %v418
        %v583 = vpop.f32.mrf.mxu0
        %v584 = vadd.f32 %v553, %v583
        %585 = vmatmul.f32.gmra.mxu0 %v421
        %v586 = vpop.f32.mrf.mxu0
        %v587 = vadd.f32 %v558, %v586
        %588 = vdwg.mxu0
        %589 = vmatpush.xpose.msra.mxu0 %v409
        %590 = vmatpush.xpose.msra.mxu0 %v406
        %591 = vmatpush.xpose.msra.mxu0 %v403
        %592 = vmatpush.xpose.msra.mxu0 %v400
        %593 = vmatpush.xpose.msra.mxu0 %v397
        %594 = vmatpush.xpose.msra.mxu0 %v394
        %595 = vmatpush.xpose.msra.mxu0 %v391
        %596 = vmatpush.xpose.msra.mxu0 %v388
        %597 = vmatpush.xpose.msra.mxu0 %v385
        %598 = vmatpush.xpose.msra.mxu0 %v382
        %599 = vmatpush.xpose.msra.mxu0 %v379
        %600 = vmatpush.xpose.msra.mxu0 %v376
        %601 = vmatpush.xpose.msra.mxu0 %v373
        %602 = vmatpush.xpose.msra.mxu0 %v370
        %603 = vmatpush.xpose.msra.mxu0 %v367
        %604 = vmatpush.xpose.msra.mxu0 %v364
        %605 = vmatmul.f32.gmra.mxu0 %v412
        %v606 = vpop.f32.mrf.mxu0
        %v607 = vadd.f32 %v543, %v606
        %608 = vmatmul.f32.gmra.mxu0 %v415
        %v609 = vpop.f32.mrf.mxu0
        %v610 = vadd.f32 %v548, %v609
        %611 = vmatmul.f32.gmra.mxu0 %v418
        %v612 = vpop.f32.mrf.mxu0
        %v613 = vadd.f32 %v553, %v612
        %614 = vmatmul.f32.gmra.mxu0 %v421
        %v615 = vpop.f32.mrf.mxu0
        %v616 = vadd.f32 %v558, %v615
        %617 = vdwg.mxu0
        %618 = vst.msk [vmem:[%s266] sm:$0xff] %vm314, %v441
        %619 = vst.msk [vmem:[%s266 + $0x8] sm:$0xff] %vm314, %v444
        %620 = vst.msk [vmem:[%s266 + $0x10] sm:$0xff] %vm314, %v447
        %621 = vst.msk [vmem:[%s266 + $0x18] sm:$0xff] %vm314, %v450
        %622 = vst.msk [vmem:[%s266 + $0x20] sm:$0xff] %vm314, %v453
        %623 = vst.msk [vmem:[%s266 + $0x28] sm:$0xff] %vm314, %v456
        %624 = vst.msk [vmem:[%s266 + $0x30] sm:$0xff] %vm314, %v459
        %625 = vst.msk [vmem:[%s266 + $0x38] sm:$0xff] %vm314, %v462
        %626 = vst.msk [vmem:[%s266 + $0x40] sm:$0xff] %vm314, %v465
        %627 = vst.msk [vmem:[%s266 + $0x48] sm:$0xff] %vm314, %v468
        %628 = vst.msk [vmem:[%s266 + $0x50] sm:$0xff] %vm314, %v471
        %629 = vst.msk [vmem:[%s266 + $0x58] sm:$0xff] %vm314, %v474
        %630 = vst.msk [vmem:[%s266 + $0x60] sm:$0xff] %vm314, %v477
        %631 = vst.msk [vmem:[%s266 + $0x68] sm:$0xff] %vm314, %v480
        %632 = vst.msk [vmem:[%s266 + $0x70] sm:$0xff] %vm314, %v483
        %633 = vst.msk [vmem:[%s266 + $0x78] sm:$0xff] %vm314, %v486
        %634 = vst.msk [vmem:[%s266 + $0x80] sm:$0xff] %vm314, %v489
        %635 = vst.msk [vmem:[%s266 + $0x88] sm:$0xff] %vm314, %v492
        %636 = vst.msk [vmem:[%s266 + $0x90] sm:$0xff] %vm314, %v495
        %637 = vst.msk [vmem:[%s266 + $0x98] sm:$0xff] %vm314, %v498
        %638 = vst.msk [vmem:[%s266 + $0xa0] sm:$0xff] %vm314, %v501
        %639 = vst.msk [vmem:[%s266 + $0xa8] sm:$0xff] %vm314, %v504
        %640 = vst.msk [vmem:[%s266 + $0xb0] sm:$0xff] %vm314, %v507
        %641 = vst.msk [vmem:[%s266 + $0xb8] sm:$0xff] %vm314, %v510
        %642 = vst.msk [vmem:[%s266 + $0xc0] sm:$0xff] %vm314, %v513
        %643 = vst.msk [vmem:[%s266 + $0xc8] sm:$0xff] %vm314, %v516
        %644 = vst.msk [vmem:[%s266 + $0xd0] sm:$0xff] %vm314, %v519
        %645 = vst.msk [vmem:[%s266 + $0xd8] sm:$0xff] %vm314, %v522
        %646 = vst.msk [vmem:[%s266 + $0xe0] sm:$0xff] %vm314, %v525
        %647 = vst.msk [vmem:[%s266 + $0xe8] sm:$0xff] %vm314, %v528
        %648 = vst.msk [vmem:[%s266 + $0xf0] sm:$0xff] %vm314, %v531
        %649 = vst.msk [vmem:[%s266 + $0xf8] sm:$0xff] %vm314, %v534
        %v650 = vpack.c.bf16 %v607, %v578
        %v651 = vpack.c.bf16 %v610, %v581
        %v652 = vpack.c.bf16 %v613, %v584
        %v653 = vpack.c.bf16 %v616, %v587
        %654 = vst [vmem:[%s249] sm:$0xff] %v650
        %655 = vst [vmem:[%s249 + $0x8] sm:$0xff] %v651
        %656 = vst [vmem:[%s249 + $0x10] sm:$0xff] %v652
        %657 = vst [vmem:[%s249 + $0x18] sm:$0xff] %v653
        %v658 = vmul.f32 %v578, %v578
        %v659 = vmul.f32 %v607, %v607
        %v660 = vmul.f32 %v581, %v581
        %v661 = vmul.f32 %v610, %v610
        %v662 = vmul.f32 %v584, %v584
        %v663 = vmul.f32 %v613, %v613
        %v664 = vmul.f32 %v587, %v587
        %v665 = vmul.f32 %v616, %v616
        %v666 = vadd.f32 %v658, %v660
        %v667 = vadd.f32 %v666, %v662
        %v668 = vadd.f32 %v667, %v664
        %v669 = vrot.slane %v668, 4
        %v670 = vadd.f32 %v668, %v669
        %v671 = vrot.slane %v670, 2
        %v672 = vadd.f32 %v670, %v671
        %v673 = vrot.slane %v672, 1
        %v674 = vadd.f32 %v672, %v673
        %v675 = vadd.f32 %v659, %v661
        %v676 = vadd.f32 %v675, %v663
        %v677 = vadd.f32 %v676, %v665
        %v678 = vrot.slane %v677, 4
        %v679 = vadd.f32 %v677, %v678
        %v680 = vrot.slane %v679, 2
        %v681 = vadd.f32 %v679, %v680
        %v682 = vrot.slane %v681, 1
        %v683 = vadd.f32 %v681, %v682
        %v686 = vrot.slane %v683, 7
        %vm687 = vcmask 1040384
        %v688 = vsel %vm687, %v674, %v686
        %v690 = vlaneseq
        %vm691 = vcmp.ge.s32.totalorder %v690, 0
        %vm692 = vcmp.lt.s32.totalorder %v690, 256
        %vm693 = vmand %vm691, %vm692
        %694 = vst.msk [vmem:[%s272] sm:$0x3] %vm693, %v688
        %s695 = smul.u32 32, %s18
        %p696 = scmp.lt.s32.totalorder %s695, 127
        %s697 = scalar_select %p696, %s695, 127
        %s698 = smul.addr %s697, 8
        %s699 = scalar_lea.vmem %s4, %s698
        %s700 = sand.u32 %s141, 1
        %s701 = sand.u32 %s141, 1
        %s702 = smul.addr %s701, 32
        %s703 = scalar_lea.vmem [#allocation2], %s702
        %s704 = smul.u32 2, %s18
        %p705 = scmp.lt.s32.totalorder %s704, 7
        %s706 = scalar_select %p705, %s704, 7
        %s707 = scalar_lea.vmem %s6, %s706
        // Predicated region
        $region37: #{vq_forward.2} parent=35 // pred_check
          %p708 = pneg %p125
        $region38: #{vq_forward.2} parent=35 // pred_check_branch
          %710 = sbr.rel (%p708) target = $region40
        $region39: #{vq_forward.2} parent=35 // pred_region
          %s711 = smul.u32 32, %s18
        $region40: #{vq_forward.2} parent=35 // pred_fallthru
          _
        // Predicated region
        $region41: #{vq_forward.2} parent=35 // pred_check
          %p712 = pneg %p151
        $region42: #{vq_forward.2} parent=35 // pred_check_branch
          %714 = sbr.rel (%p712) target = $region44
        $region43: #{vq_forward.2} parent=35 // pred_region
          %s715 = smul.u32 2, %s18
          %s716 = smul.addr %s715, 4
          %s717 = scalar_lea.vmem %s5, %s716
          // Predicated region
          $region45: #{vq_forward.2} parent=43 // pred_check
            _
          $region46: #{vq_forward.2} parent=43 // pred_check_branch
            %719 = sbr.rel (0) target = $region48
          $region47: #{vq_forward.2} parent=43 // pred_region
            // Predicated region
            $region49: #{vq_forward.2} parent=47 // pred_check
              _
            $region50: #{vq_forward.2} parent=47 // pred_check_branch
              %721 = sbr.rel (0) target = $region52
            $region51: #{vq_forward.2} parent=47 // pred_region
              // Predicated region
              $region64: #{vq_forward.2} parent=51 // pred_check
                _
              $region65: #{vq_forward.2} parent=51 // pred_check_branch
                %743 = sbr.rel (0) target = $region67
              $region66: #{vq_forward.2} parent=51 // pred_region
                loop: start=0, step=1, limit=1
                $region68: #{vq_forward.2} parent=66 // loop_pre_header
                  _
                $region69: #{vq_forward.2} parent=66 // loop_header
                  %s745 = sphi 0, %s749
                  %p746 = scmp.ge.s32.totalorder %s745, 1
                  %s750 = sphi %s703, %s703
                  %s751 = sphi %s717, %s717
                $region70: #{vq_forward.2} parent=66 // loop_header_branch
                  %748 = sbr.rel (%p746) target = $region74
                $region71: #{vq_forward.2} parent=66 // loop_body
                  %v752 = vld [vmem:[%s750] sm:$0xff]
                  %753 = vst [vmem:[%s751] sm:$0xff] %v752
                  %v754 = vld [vmem:[%s750 + $0x8] sm:$0xff]
                  %755 = vst [vmem:[%s751 + $0x20] sm:$0xff] %v754
                  %v756 = vld [vmem:[%s750 + $0x10] sm:$0xff]
                  %757 = vst [vmem:[%s751 + $0x40] sm:$0xff] %v756
                  %v758 = vld [vmem:[%s750 + $0x18] sm:$0xff]
                  %759 = vst [vmem:[%s751 + $0x60] sm:$0xff] %v758
                $region72: #{vq_forward.2} parent=66 // loop_footer
                  %s749 = sadd.s32 1, %s745
                $region73: #{vq_forward.2} parent=66 // loop_footer_branch
                  %744 = sbr.rel target = $region69
                $region74: #{vq_forward.2} parent=66 // loop_exit
                  _
              $region67: #{vq_forward.2} parent=51 // pred_fallthru
                _
              // Predicated region
              $region75: #{vq_forward.2} parent=51 // pred_check
                _
              $region76: #{vq_forward.2} parent=51 // pred_check_branch
                %761 = sbr.rel target = $region78
              $region77: #{vq_forward.2} parent=51 // pred_region
                _
              $region78: #{vq_forward.2} parent=51 // pred_fallthru
                _
            $region52: #{vq_forward.2} parent=47 // pred_fallthru
              _
            // Predicated region
            $region53: #{vq_forward.2} parent=47 // pred_check
              _
            $region54: #{vq_forward.2} parent=47 // pred_check_branch
              %723 = sbr.rel target = $region56
            $region55: #{vq_forward.2} parent=47 // pred_region
              %s725 = ssub.s32 256, 1
              loop: start=0, step=1, limit=1
              $region57: #{vq_forward.2} parent=55 // loop_pre_header
                _
              $region58: #{vq_forward.2} parent=55 // loop_header
                %s727 = sphi 0, %s731
                %p728 = scmp.ge.s32.totalorder %s727, 1
                %s732 = sphi %s703, %s703
                %s733 = sphi %s717, %s717
              $region59: #{vq_forward.2} parent=55 // loop_header_branch
                %730 = sbr.rel (%p728) target = $region63
              $region60: #{vq_forward.2} parent=55 // loop_body
                %v734 = vld [vmem:[%s732] sm:%s725]
                %735 = vst [vmem:[%s733] sm:%s725] %v734
                %v736 = vld [vmem:[%s732 + $0x8] sm:%s725]
                %737 = vst [vmem:[%s733 + $0x20] sm:%s725] %v736
                %v738 = vld [vmem:[%s732 + $0x10] sm:%s725]
                %739 = vst [vmem:[%s733 + $0x40] sm:%s725] %v738
                %v740 = vld [vmem:[%s732 + $0x18] sm:%s725]
                %741 = vst [vmem:[%s733 + $0x60] sm:%s725] %v740
              $region61: #{vq_forward.2} parent=55 // loop_footer
                %s731 = sadd.s32 1, %s727
              $region62: #{vq_forward.2} parent=55 // loop_footer_branch
                %726 = sbr.rel target = $region58
              $region63: #{vq_forward.2} parent=55 // loop_exit
                _
            $region56: #{vq_forward.2} parent=47 // pred_fallthru
              _
          $region48: #{vq_forward.2} parent=43 // pred_fallthru
            _
          %762 = vnop
        $region44: #{vq_forward.2} parent=35 // pred_fallthru
          _
        // Predicated region
        $region79: #{vq_forward.2} parent=35 // pred_check
          %p763 = pneg %p177
        $region80: #{vq_forward.2} parent=35 // pred_check_branch
          %765 = sbr.rel (%p763) target = $region82
        $region81: #{vq_forward.2} parent=35 // pred_region
          %s766 = smul.u32 2, %s18
        $region82: #{vq_forward.2} parent=35 // pred_fallthru
          _
      $region36: #{vq_forward.2} parent=5 // pred_fallthru
        _
      %p767 = scmp.le.s32.totalorder 2, %s13
      // Predicated region
      $region83: #{vq_forward.2} parent=5 // pred_check
        %p768 = pneg %p767
      $region84: #{vq_forward.2} parent=5 // pred_check_branch
        %770 = sbr.rel (%p768) target = $region86
      $region85: #{vq_forward.2} parent=5 // pred_region
        %s771 = ssub.s32 %s13, 2
        // Predicated region
        $region87: #{vq_forward.2} parent=85 // pred_check
          %p772 = pneg %p131
        $region88: #{vq_forward.2} parent=85 // pred_check_branch
          %774 = sbr.rel (%p772) target = $region90
        $region89: #{vq_forward.2} parent=85 // pred_region
          %s775 = smul.u32 32, %s19
          %p776 = scmp.lt.s32.totalorder %s775, 127
          %s777 = scalar_select %p776, %s775, 127
          %s778 = smul.addr %s777, 8
          %s779 = scalar_lea.vmem %s4, %s778
        $region90: #{vq_forward.2} parent=85 // pred_fallthru
          _
        // Predicated region
        $region91: #{vq_forward.2} parent=85 // pred_check
          %p780 = pneg %p157
        $region92: #{vq_forward.2} parent=85 // pred_check_branch
          %782 = sbr.rel (%p780) target = $region94
        $region93: #{vq_forward.2} parent=85 // pred_region
          %s783 = sand.u32 %s142, 1
          %s784 = sand.u32 %s142, 1
          %s785 = smul.addr %s784, 32
          %s786 = scalar_lea.vmem [#allocation2], %s785
        $region94: #{vq_forward.2} parent=85 // pred_fallthru
          _
        // Predicated region
        $region95: #{vq_forward.2} parent=85 // pred_check
          %p787 = pneg %p183
        $region96: #{vq_forward.2} parent=85 // pred_check_branch
          %789 = sbr.rel (%p787) target = $region98
        $region97: #{vq_forward.2} parent=85 // pred_region
          %s790 = smul.u32 2, %s19
          %p791 = scmp.lt.s32.totalorder %s790, 7
          %s792 = scalar_select %p791, %s790, 7
          %s793 = scalar_lea.vmem %s6, %s792
        $region98: #{vq_forward.2} parent=85 // pred_fallthru
          _
      $region86: #{vq_forward.2} parent=5 // pred_fallthru
        _
    $region6: #{vq_forward.2} parent=1 // loop_footer
      %s17 = sadd.s32 1, %s13
    $region7: #{vq_forward.2} parent=1 // loop_footer_branch
      %12 = sbr.rel target = $region3
    $region8: #{vq_forward.2} parent=1 // loop_exit
      _

// kernel: vq_forward.3
$region0: #{vq_forward.3}
  #allocation0 [shape = 'u32[]', space=smem, size = 0x4, offset = 0x4, fixed_abs, tag = 'smem constant byte address 0x4 - core index']
  #allocation1 [shape = 'u32[72,128]{1,0:T(1,128)}', space=vmem, size = 0x9000, scoped, tag = 'internal scratch']
  %s0 = inlined_call_operand.vmem [shape: f32[512,16], index: 0, kind: input, shape index: {}]
  %s1 = inlined_call_operand.vmem [shape: f32[16,32], index: 1, kind: input, shape index: {}]
  %s2 = inlined_call_operand.vmem [shape: f32[1,32], index: 2, kind: input, shape index: {}]
  %s3 = inlined_call_operand.vmem [shape: bf16[32,1024], index: 3, kind: input, shape index: {}]
  %s4 = inlined_call_operand.vmem [shape: f32[1,1024], index: 4, kind: input, shape index: {}]
  %s5 = inlined_call_operand.vmem [shape: s32[512,1], index: 5, kind: output, shape index: {}]
  %s6 = sld [smem:[#allocation0]]
  $region60: #{vq_forward.3} parent=0
    _
  %s8 = ssub.s32 1, %s6
  %s9 = scalar_select 0, %s8, %s6
  loop: start=0, step=1, limit=4
  $region2: #{vq_forward.3} parent=0 // loop_pre_header
    _
  $region3: #{vq_forward.3} parent=0 // loop_header
    %s11 = sphi 0, %s15
    %p12 = scmp.ge.s32.totalorder %s11, 4
    %s21 = sphi 0, %s23
    %s24 = sphi 0, %s21
    %s25 = sphi 0, %s24
    %s41 = sphi 0, %s25
    %s45 = sphi 0, %s45
    %s47 = sphi 0, %s45
    %s48 = sphi 0, %s47
    %s62 = sphi 0, %s48
    %s66 = sphi 0, %s66
    %s68 = sphi 0, %s66
    %s69 = sphi 0, %s68
    %s83 = sphi 0, %s69
    %s87 = sphi 0, %s87
    %s89 = sphi 0, %s87
    %s90 = sphi 0, %s89
    %s104 = sphi 0, %s90
    %s108 = sphi 0, %s108
    %s110 = sphi 0, %s108
    %s111 = sphi 0, %s110
    %s125 = sphi 0, %s111
    %s131 = sphi 0, %s133
    %s134 = sphi 0, %s131
    %s135 = sphi 0, %s134
    %s151 = sphi 0, %s135
  $region4: #{vq_forward.3} parent=0 // loop_header_branch
    %14 = sbr.rel (%p12) target = $region8
  $region5: #{vq_forward.3} parent=0 // loop_body
    %s16 = ssub.s32 %s11, 1
    %s17 = ssub.s32 %s11, 2
    %s18 = sadd.s32 %s11, 1
    %s19 = ssub.s32 %s11, %s18
    %p20 = scmp.eq.s32.totalorder %s19, 0
    %s22 = sadd.s32 %s21, 1
    %s23 = scalar_select %p20, %s21, %s22
    %p26 = pneg %p20
    %p27 = scmp.eq.s32.totalorder %s11, 1
    %p28 = por %p26, %p27
    %p29 = scmp.ne.s32.totalorder %s21, %s24
    %p30 = scmp.eq.s32.totalorder %s11, 0
    %p31 = por %p29, %p30
    %p32 = scmp.ne.s32.totalorder %s21, %s24
    %p33 = scmp.eq.s32.totalorder %s16, 1
    %p34 = por %p32, %p33
    %p35 = scmp.ne.s32.totalorder %s24, %s25
    %p36 = scmp.eq.s32.totalorder %s16, 0
    %p37 = por %p35, %p36
    %p38 = scmp.ne.s32.totalorder %s24, %s25
    %p39 = scmp.eq.s32.totalorder %s17, 1
    %p40 = por %p38, %p39
    %p42 = scmp.ne.s32.totalorder %s25, %s41
    %p43 = scmp.eq.s32.totalorder %s17, 0
    %p44 = por %p42, %p43
    %s46 = sadd.s32 %s45, 1
    %p49 = scmp.eq.s32.totalorder %s11, 1
    %p50 = scmp.ne.s32.totalorder %s45, %s47
    %p51 = scmp.eq.s32.totalorder %s11, 0
    %p52 = por %p50, %p51
    %p53 = scmp.ne.s32.totalorder %s45, %s47
    %p54 = scmp.eq.s32.totalorder %s16, 1
    %p55 = por %p53, %p54
    %p56 = scmp.ne.s32.totalorder %s47, %s48
    %p57 = scmp.eq.s32.totalorder %s16, 0
    %p58 = por %p56, %p57
    %p59 = scmp.ne.s32.totalorder %s47, %s48
    %p60 = scmp.eq.s32.totalorder %s17, 1
    %p61 = por %p59, %p60
    %p63 = scmp.ne.s32.totalorder %s48, %s62
    %p64 = scmp.eq.s32.totalorder %s17, 0
    %p65 = por %p63, %p64
    %s67 = sadd.s32 %s66, 1
    %p70 = scmp.eq.s32.totalorder %s11, 1
    %p71 = scmp.ne.s32.totalorder %s66, %s68
    %p72 = scmp.eq.s32.totalorder %s11, 0
    %p73 = por %p71, %p72
    %p74 = scmp.ne.s32.totalorder %s66, %s68
    %p75 = scmp.eq.s32.totalorder %s16, 1
    %p76 = por %p74, %p75
    %p77 = scmp.ne.s32.totalorder %s68, %s69
    %p78 = scmp.eq.s32.totalorder %s16, 0
    %p79 = por %p77, %p78
    %p80 = scmp.ne.s32.totalorder %s68, %s69
    %p81 = scmp.eq.s32.totalorder %s17, 1
    %p82 = por %p80, %p81
    %p84 = scmp.ne.s32.totalorder %s69, %s83
    %p85 = scmp.eq.s32.totalorder %s17, 0
    %p86 = por %p84, %p85
    %s88 = sadd.s32 %s87, 1
    %p91 = scmp.eq.s32.totalorder %s11, 1
    %p92 = scmp.ne.s32.totalorder %s87, %s89
    %p93 = scmp.eq.s32.totalorder %s11, 0
    %p94 = por %p92, %p93
    %p95 = scmp.ne.s32.totalorder %s87, %s89
    %p96 = scmp.eq.s32.totalorder %s16, 1
    %p97 = por %p95, %p96
    %p98 = scmp.ne.s32.totalorder %s89, %s90
    %p99 = scmp.eq.s32.totalorder %s16, 0
    %p100 = por %p98, %p99
    %p101 = scmp.ne.s32.totalorder %s89, %s90
    %p102 = scmp.eq.s32.totalorder %s17, 1
    %p103 = por %p101, %p102
    %p105 = scmp.ne.s32.totalorder %s90, %s104
    %p106 = scmp.eq.s32.totalorder %s17, 0
    %p107 = por %p105, %p106
    %s109 = sadd.s32 %s108, 1
    %p112 = scmp.eq.s32.totalorder %s11, 1
    %p113 = scmp.ne.s32.totalorder %s108, %s110
    %p114 = scmp.eq.s32.totalorder %s11, 0
    %p115 = por %p113, %p114
    %p116 = scmp.ne.s32.totalorder %s108, %s110
    %p117 = scmp.eq.s32.totalorder %s16, 1
    %p118 = por %p116, %p117
    %p119 = scmp.ne.s32.totalorder %s110, %s111
    %p120 = scmp.eq.s32.totalorder %s16, 0
    %p121 = por %p119, %p120
    %p122 = scmp.ne.s32.totalorder %s110, %s111
    %p123 = scmp.eq.s32.totalorder %s17, 1
    %p124 = por %p122, %p123
    %p126 = scmp.ne.s32.totalorder %s111, %s125
    %p127 = scmp.eq.s32.totalorder %s17, 0
    %p128 = por %p126, %p127
    %s129 = ssub.s32 %s11, %s18
    %p130 = scmp.eq.s32.totalorder %s129, 0
    %s132 = sadd.s32 %s131, 1
    %s133 = scalar_select %p130, %s131, %s132
    %p136 = pneg %p130
    %p137 = scmp.eq.s32.totalorder %s11, 1
    %p138 = por %p136, %p137
    %p139 = scmp.ne.s32.totalorder %s131, %s134
    %p140 = scmp.eq.s32.totalorder %s11, 0
    %p141 = por %p139, %p140
    %p142 = scmp.ne.s32.totalorder %s131, %s134
    %p143 = scmp.eq.s32.totalorder %s16, 1
    %p144 = por %p142, %p143
    %p145 = scmp.ne.s32.totalorder %s134, %s135
    %p146 = scmp.eq.s32.totalorder %s16, 0
    %p147 = por %p145, %p146
    %p148 = scmp.ne.s32.totalorder %s134, %s135
    %p149 = scmp.eq.s32.totalorder %s17, 1
    %p150 = por %p148, %p149
    %p152 = scmp.ne.s32.totalorder %s135, %s151
    %p153 = scmp.eq.s32.totalorder %s17, 0
    %p154 = por %p152, %p153
    %p155 = scmp.le.s32.totalorder 1, %s11
    %p156 = scmp.lt.s32.totalorder %s11, 3
    %p157 = pnand %p155, %p156
    %p158 = pneg %p157
    // Predicated region
    $region9: #{vq_forward.3} parent=5 // pred_check
      _
    $region10: #{vq_forward.3} parent=5 // pred_check_branch
      %160 = sbr.rel (%p157) target = $region12
    $region11: #{vq_forward.3} parent=5 // pred_region
      %s161 = ssub.s32 %s11, 1
      // Predicated region
      $region13: #{vq_forward.3} parent=11 // pred_check
        %p162 = pneg %p58
      $region14: #{vq_forward.3} parent=11 // pred_check_branch
        %164 = sbr.rel (%p162) target = $region16
      $region15: #{vq_forward.3} parent=11 // pred_region
        _
      $region16: #{vq_forward.3} parent=11 // pred_fallthru
        _
      // Predicated region
      $region17: #{vq_forward.3} parent=11 // pred_check
        %p165 = pneg %p79
      $region18: #{vq_forward.3} parent=11 // pred_check_branch
        %167 = sbr.rel (%p165) target = $region20
      $region19: #{vq_forward.3} parent=11 // pred_region
        _
      $region20: #{vq_forward.3} parent=11 // pred_fallthru
        _
      // Predicated region
      $region21: #{vq_forward.3} parent=11 // pred_check
        %p168 = pneg %p100
      $region22: #{vq_forward.3} parent=11 // pred_check_branch
        %170 = sbr.rel (%p168) target = $region24
      $region23: #{vq_forward.3} parent=11 // pred_region
        _
      $region24: #{vq_forward.3} parent=11 // pred_fallthru
        _
      // Predicated region
      $region25: #{vq_forward.3} parent=11 // pred_check
        %p171 = pneg %p121
      $region26: #{vq_forward.3} parent=11 // pred_check_branch
        %173 = sbr.rel (%p171) target = $region28
      $region27: #{vq_forward.3} parent=11 // pred_region
        _
      $region28: #{vq_forward.3} parent=11 // pred_fallthru
        _
    $region12: #{vq_forward.3} parent=5 // pred_fallthru
      _
    %p174 = scmp.lt.s32.totalorder %s11, 2
    // Predicated region
    $region29: #{vq_forward.3} parent=5 // pred_check
      %p175 = pneg %p174
    $region30: #{vq_forward.3} parent=5 // pred_check_branch
      %177 = sbr.rel (%p175) target = $region32
    $region31: #{vq_forward.3} parent=5 // pred_region
      // Predicated region
      $region33: #{vq_forward.3} parent=31 // pred_check
        %p178 = pneg %p31
      $region34: #{vq_forward.3} parent=31 // pred_check_branch
        %180 = sbr.rel (%p178) target = $region36
      $region35: #{vq_forward.3} parent=31 // pred_region
        %s181 = smul.u32 32, %s11
        %p182 = scmp.lt.s32.totalorder %s181, 63
        %s183 = scalar_select %p182, %s181, 63
        %s184 = smul.addr %s183, 8
        %s185 = scalar_lea.vmem %s0, %s184
        %s186 = smul.u32 32, %s11
      $region36: #{vq_forward.3} parent=31 // pred_fallthru
        _
    $region32: #{vq_forward.3} parent=5 // pred_fallthru
      _
    %p187 = scmp.le.s32.totalorder 1, %s11
    %p188 = scmp.lt.s32.totalorder %s11, 3
    %p189 = pnand %p187, %p188
    %p190 = pneg %p189
    // Predicated region
    $region37: #{vq_forward.3} parent=5 // pred_check
      _
    $region38: #{vq_forward.3} parent=5 // pred_check_branch
      %192 = sbr.rel (%p189) target = $region40
    $region39: #{vq_forward.3} parent=5 // pred_region
      %s193 = ssub.s32 %s11, 1
      %s194 = smul.u32 32, %s16
      %p195 = scmp.lt.s32.totalorder %s194, 63
      %s196 = scalar_select %p195, %s194, 63
      %s197 = smul.addr %s196, 8
      %s198 = scalar_lea.vmem %s0, %s197
      %p199 = pneg %p37
      %p200 = pneg %p34
      %p201 = pneg %p58
      %p202 = pneg %p55
      %p203 = pneg %p79
      %p204 = pneg %p76
      %p205 = pneg %p100
      %p206 = pneg %p97
      %p207 = pneg %p121
      %p208 = pneg %p118
      %p209 = pneg %p147
      %p210 = pneg %p144
      %s211 = smul.u32 32, %s16
      %p212 = scmp.lt.s32.totalorder %s211, 63
      %s213 = scalar_select %p212, %s211, 63
      %s214 = smul.addr %s213, 8
      %s215 = scalar_lea.vmem %s5, %s214
      %s216 = smul.u32 32, %s16
      %p217 = scmp.lt.s32.totalorder %s216, 63
      %s218 = scalar_select %p217, %s216, 63
      %s219 = smul.addr %s218, 8
      %s220 = scalar_lea.vmem %s0, %s219
      %s221 = smul.u32 32, %s16
      %s222 = smul.u32 32, %s16
      %p223 = scmp.lt.s32.totalorder %s222, 63
      %s224 = scalar_select %p223, %s222, 63
      %s225 = smul.addr %s224, 8
      %s226 = scalar_lea.vmem %s5, %s225
      %s227 = smul.u32 32, %s16
      %v229 = vld [vmem:[%s220] sm:$0xff]
      %v230 = vld [vmem:[%s220 + $0x8] sm:$0xff]
      %v231 = vld [vmem:[%s220 + $0x10] sm:$0xff]
      %v232 = vld [vmem:[%s220 + $0x18] sm:$0xff]
      %v233 = vld [vmem:[%s220 + $0x20] sm:$0xff]
      %v234 = vld [vmem:[%s220 + $0x28] sm:$0xff]
      %v235 = vld [vmem:[%s220 + $0x30] sm:$0xff]
      %v236 = vld [vmem:[%s220 + $0x38] sm:$0xff]
      %v237 = vld [vmem:[%s220 + $0x40] sm:$0xff]
      %v238 = vld [vmem:[%s220 + $0x48] sm:$0xff]
      %v239 = vld [vmem:[%s220 + $0x50] sm:$0xff]
      %v240 = vld [vmem:[%s220 + $0x58] sm:$0xff]
      %v241 = vld [vmem:[%s220 + $0x60] sm:$0xff]
      %v242 = vld [vmem:[%s220 + $0x68] sm:$0xff]
      %v243 = vld [vmem:[%s220 + $0x70] sm:$0xff]
      %v244 = vld [vmem:[%s220 + $0x78] sm:$0xff]
      %v245 = vld [vmem:[%s220 + $0x80] sm:$0xff]
      %v246 = vld [vmem:[%s220 + $0x88] sm:$0xff]
      %v247 = vld [vmem:[%s220 + $0x90] sm:$0xff]
      %v248 = vld [vmem:[%s220 + $0x98] sm:$0xff]
      %v249 = vld [vmem:[%s220 + $0xa0] sm:$0xff]
      %v250 = vld [vmem:[%s220 + $0xa8] sm:$0xff]
      %v251 = vld [vmem:[%s220 + $0xb0] sm:$0xff]
      %v252 = vld [vmem:[%s220 + $0xb8] sm:$0xff]
      %v253 = vld [vmem:[%s220 + $0xc0] sm:$0xff]
      %v254 = vld [vmem:[%s220 + $0xc8] sm:$0xff]
      %v255 = vld [vmem:[%s220 + $0xd0] sm:$0xff]
      %v256 = vld [vmem:[%s220 + $0xd8] sm:$0xff]
      %v257 = vld [vmem:[%s220 + $0xe0] sm:$0xff]
      %v258 = vld [vmem:[%s220 + $0xe8] sm:$0xff]
      %v259 = vld [vmem:[%s220 + $0xf0] sm:$0xff]
      %v260 = vld [vmem:[%s220 + $0xf8] sm:$0xff]
      %v261 = vld [vmem:[%s1] sm:$0xff]
      %v262 = vld [vmem:[%s1 + $0x8] sm:$0xff]
      %v263 = vld [vmem:[%s2] sm:$0x1]
      %v265 = vperm.slane %v263, 0
      %vm267 = vcmask 130048
      %v269 = vsel %vm267, %v229, 0
      %v272 = vsel %vm267, %v230, 0
      %v275 = vsel %vm267, %v231, 0
      %v278 = vsel %vm267, %v232, 0
      %v281 = vsel %vm267, %v233, 0
      %v284 = vsel %vm267, %v234, 0
      %v287 = vsel %vm267, %v235, 0
      %v290 = vsel %vm267, %v236, 0
      %v293 = vsel %vm267, %v237, 0
      %v296 = vsel %vm267, %v238, 0
      %v299 = vsel %vm267, %v239, 0
      %v302 = vsel %vm267, %v240, 0
      %v305 = vsel %vm267, %v241, 0
      %v308 = vsel %vm267, %v242, 0
      %v311 = vsel %vm267, %v243, 0
      %v314 = vsel %vm267, %v244, 0
      %v317 = vsel %vm267, %v245, 0
      %v320 = vsel %vm267, %v246, 0
      %v323 = vsel %vm267, %v247, 0
      %v326 = vsel %vm267, %v248, 0
      %v329 = vsel %vm267, %v249, 0
      %v332 = vsel %vm267, %v250, 0
      %v335 = vsel %vm267, %v251, 0
      %v338 = vsel %vm267, %v252, 0
      %v341 = vsel %vm267, %v253, 0
      %v344 = vsel %vm267, %v254, 0
      %v347 = vsel %vm267, %v255, 0
      %v350 = vsel %vm267, %v256, 0
      %v353 = vsel %vm267, %v257, 0
      %v356 = vsel %vm267, %v258, 0
      %v359 = vsel %vm267, %v259, 0
      %v362 = vsel %vm267, %v260, 0
      %364 = vmatpush.msra.mxu0 0.0
      %365 = vmatpush.msra.mxu0 0.0
      %366 = vmatpush.msra.mxu0 0.0
      %367 = vmatpush.msra.mxu0 0.0
      %368 = vmatpush.msra.mxu0 0.0
      %369 = vmatpush.msra.mxu0 0.0
      %370 = vmatpush.msra.mxu0 0.0
      %371 = vmatpush.msra.mxu0 0.0
      %372 = vmatpush.msra.mxu0 0.0
      %373 = vmatpush.msra.mxu0 0.0
      %374 = vmatpush.msra.mxu0 0.0
      %375 = vmatpush.msra.mxu0 0.0
      %376 = vmatpush.msra.mxu0 0.0
      %377 = vmatpush.msra.mxu0 0.0
      %378 = vmatpush.msra.mxu0 %v262
      %379 = vmatpush.msra.mxu0 %v261
      %380 = vmatmul.f32.gmra.mxu0 %v269
      %v381 = vpop.f32.mrf.mxu0
      %v382 = vadd.f32 %v265, %v381
      %383 = vmatmul.f32.gmra.mxu0 %v272
      %v384 = vpop.f32.mrf.mxu0
      %v385 = vadd.f32 %v265, %v384
      %386 = vmatmul.f32.gmra.mxu0 %v275
      %v387 = vpop.f32.mrf.mxu0
      %v388 = vadd.f32 %v265, %v387
      %389 = vmatmul.f32.gmra.mxu0 %v278
      %v390 = vpop.f32.mrf.mxu0
      %v391 = vadd.f32 %v265, %v390
      %392 = vmatmul.f32.gmra.mxu0 %v281
      %v393 = vpop.f32.mrf.mxu0
      %v394 = vadd.f32 %v265, %v393
      %395 = vmatmul.f32.gmra.mxu0 %v284
      %v396 = vpop.f32.mrf.mxu0
      %v397 = vadd.f32 %v265, %v396
      %398 = vmatmul.f32.gmra.mxu0 %v287
      %v399 = vpop.f32.mrf.mxu0
      %v400 = vadd.f32 %v265, %v399
      %401 = vmatmul.f32.gmra.mxu0 %v290
      %v402 = vpop.f32.mrf.mxu0
      %v403 = vadd.f32 %v265, %v402
      %404 = vmatmul.f32.gmra.mxu0 %v293
      %v405 = vpop.f32.mrf.mxu0
      %v406 = vadd.f32 %v265, %v405
      %407 = vmatmul.f32.gmra.mxu0 %v296
      %v408 = vpop.f32.mrf.mxu0
      %v409 = vadd.f32 %v265, %v408
      %410 = vmatmul.f32.gmra.mxu0 %v299
      %v411 = vpop.f32.mrf.mxu0
      %v412 = vadd.f32 %v265, %v411
      %413 = vmatmul.f32.gmra.mxu0 %v302
      %v414 = vpop.f32.mrf.mxu0
      %v415 = vadd.f32 %v265, %v414
      %416 = vmatmul.f32.gmra.mxu0 %v305
      %v417 = vpop.f32.mrf.mxu0
      %v418 = vadd.f32 %v265, %v417
      %419 = vmatmul.f32.gmra.mxu0 %v308
      %v420 = vpop.f32.mrf.mxu0
      %v421 = vadd.f32 %v265, %v420
      %422 = vmatmul.f32.gmra.mxu0 %v311
      %v423 = vpop.f32.mrf.mxu0
      %v424 = vadd.f32 %v265, %v423
      %425 = vmatmul.f32.gmra.mxu0 %v314
      %v426 = vpop.f32.mrf.mxu0
      %v427 = vadd.f32 %v265, %v426
      %428 = vmatmul.f32.gmra.mxu0 %v317
      %v429 = vpop.f32.mrf.mxu0
      %v430 = vadd.f32 %v265, %v429
      %431 = vmatmul.f32.gmra.mxu0 %v320
      %v432 = vpop.f32.mrf.mxu0
      %v433 = vadd.f32 %v265, %v432
      %434 = vmatmul.f32.gmra.mxu0 %v323
      %v435 = vpop.f32.mrf.mxu0
      %v436 = vadd.f32 %v265, %v435
      %437 = vmatmul.f32.gmra.mxu0 %v326
      %v438 = vpop.f32.mrf.mxu0
      %v439 = vadd.f32 %v265, %v438
      %440 = vmatmul.f32.gmra.mxu0 %v329
      %v441 = vpop.f32.mrf.mxu0
      %v442 = vadd.f32 %v265, %v441
      %443 = vmatmul.f32.gmra.mxu0 %v332
      %v444 = vpop.f32.mrf.mxu0
      %v445 = vadd.f32 %v265, %v444
      %446 = vmatmul.f32.gmra.mxu0 %v335
      %v447 = vpop.f32.mrf.mxu0
      %v448 = vadd.f32 %v265, %v447
      %449 = vmatmul.f32.gmra.mxu0 %v338
      %v450 = vpop.f32.mrf.mxu0
      %v451 = vadd.f32 %v265, %v450
      %452 = vmatmul.f32.gmra.mxu0 %v341
      %v453 = vpop.f32.mrf.mxu0
      %v454 = vadd.f32 %v265, %v453
      %455 = vmatmul.f32.gmra.mxu0 %v344
      %v456 = vpop.f32.mrf.mxu0
      %v457 = vadd.f32 %v265, %v456
      %458 = vmatmul.f32.gmra.mxu0 %v347
      %v459 = vpop.f32.mrf.mxu0
      %v460 = vadd.f32 %v265, %v459
      %461 = vmatmul.f32.gmra.mxu0 %v350
      %v462 = vpop.f32.mrf.mxu0
      %v463 = vadd.f32 %v265, %v462
      %464 = vmatmul.f32.gmra.mxu0 %v353
      %v465 = vpop.f32.mrf.mxu0
      %v466 = vadd.f32 %v265, %v465
      %467 = vmatmul.f32.gmra.mxu0 %v356
      %v468 = vpop.f32.mrf.mxu0
      %v469 = vadd.f32 %v265, %v468
      %470 = vmatmul.f32.gmra.mxu0 %v359
      %v471 = vpop.f32.mrf.mxu0
      %v472 = vadd.f32 %v265, %v471
      %473 = vmatmul.f32.gmra.mxu0 %v362
      %v474 = vpop.f32.mrf.mxu0
      %v475 = vadd.f32 %v265, %v474
      %476 = vdwg.mxu0
      %v477 = vmul.f32 %v382, -2.0
      %v478 = vmul.f32 %v385, -2.0
      %v479 = vmul.f32 %v388, -2.0
      %v480 = vmul.f32 %v391, -2.0
      %v481 = vmul.f32 %v394, -2.0
      %v482 = vmul.f32 %v397, -2.0
      %v483 = vmul.f32 %v400, -2.0
      %v484 = vmul.f32 %v403, -2.0
      %v485 = vmul.f32 %v406, -2.0
      %v486 = vmul.f32 %v409, -2.0
      %v487 = vmul.f32 %v412, -2.0
      %v488 = vmul.f32 %v415, -2.0
      %v489 = vmul.f32 %v418, -2.0
      %v490 = vmul.f32 %v421, -2.0
      %v491 = vmul.f32 %v424, -2.0
      %v492 = vmul.f32 %v427, -2.0
      %v493 = vmul.f32 %v430, -2.0
      %v494 = vmul.f32 %v433, -2.0
      %v495 = vmul.f32 %v436, -2.0
      %v496 = vmul.f32 %v439, -2.0
      %v497 = vmul.f32 %v442, -2.0
      %v498 = vmul.f32 %v445, -2.0
      %v499 = vmul.f32 %v448, -2.0
      %v500 = vmul.f32 %v451, -2.0
      %v501 = vmul.f32 %v454, -2.0
      %v502 = vmul.f32 %v457, -2.0
      %v503 = vmul.f32 %v460, -2.0
      %v504 = vmul.f32 %v463, -2.0
      %v505 = vmul.f32 %v466, -2.0
      %v506 = vmul.f32 %v469, -2.0
      %v507 = vmul.f32 %v472, -2.0
      %v508 = vmul.f32 %v475, -2.0
      %v509 = vpack.c.bf16 %v478, %v477
      %v510 = vpack.c.bf16 %v480, %v479
      %v511 = vpack.c.bf16 %v482, %v481
      %v512 = vpack.c.bf16 %v484, %v483
      %v513 = vpack.c.bf16 %v486, %v485
      %v514 = vpack.c.bf16 %v488, %v487
      %v515 = vpack.c.bf16 %v490, %v489
      %v516 = vpack.c.bf16 %v492, %v491
      %v517 = vpack.c.bf16 %v494, %v493
      %v518 = vpack.c.bf16 %v496, %v495
      %v519 = vpack.c.bf16 %v498, %v497
      %v520 = vpack.c.bf16 %v500, %v499
      %v521 = vpack.c.bf16 %v502, %v501
      %v522 = vpack.c.bf16 %v504, %v503
      %v523 = vpack.c.bf16 %v506, %v505
      %v524 = vpack.c.bf16 %v508, %v507
      %v525 = vlaneseq
      %v526 = vand.u32 %v525, 127
      %v527 = vadd.s32 %v526, 128
      loop: start=0, step=1, limit=4
      $region41: #{vq_forward.3} parent=39 // loop_pre_header
        _
      $region42: #{vq_forward.3} parent=39 // loop_header
        %s529 = sphi 0, %s533
        %p530 = scmp.ge.s32.totalorder %s529, 4
        %v534 = vphi inf, %v1694
        %v535 = vphi inf, %v1695
        %v536 = vphi inf, %v1696
        %v537 = vphi inf, %v1697
        %v538 = vphi inf, %v1698
        %v539 = vphi inf, %v1699
        %v540 = vphi inf, %v1700
        %v541 = vphi inf, %v1701
        %v542 = vphi inf, %v1702
        %v543 = vphi inf, %v1703
        %v544 = vphi inf, %v1704
        %v545 = vphi inf, %v1705
        %v546 = vphi inf, %v1706
        %v547 = vphi inf, %v1707
        %v548 = vphi inf, %v1708
        %v549 = vphi inf, %v1709
        %v550 = vphi inf, %v1710
        %v551 = vphi inf, %v1711
        %v552 = vphi inf, %v1712
        %v553 = vphi inf, %v1713
        %v554 = vphi inf, %v1714
        %v555 = vphi inf, %v1715
        %v556 = vphi inf, %v1716
        %v557 = vphi inf, %v1717
        %v558 = vphi inf, %v1718
        %v559 = vphi inf, %v1719
        %v560 = vphi inf, %v1720
        %v561 = vphi inf, %v1721
        %v562 = vphi inf, %v1722
        %v563 = vphi inf, %v1723
        %v564 = vphi inf, %v1724
        %v565 = vphi inf, %v1725
        %v566 = vphi 0, %v1662
        %v567 = vphi 0, %v1663
        %v568 = vphi 0, %v1664
        %v569 = vphi 0, %v1665
        %v570 = vphi 0, %v1666
        %v571 = vphi 0, %v1667
        %v572 = vphi 0, %v1668
        %v573 = vphi 0, %v1669
        %v574 = vphi 0, %v1670
        %v575 = vphi 0, %v1671
        %v576 = vphi 0, %v1672
        %v577 = vphi 0, %v1673
        %v578 = vphi 0, %v1674
        %v579 = vphi 0, %v1675
        %v580 = vphi 0, %v1676
        %v581 = vphi 0, %v1677
        %v582 = vphi 0, %v1678
        %v583 = vphi 0, %v1679
        %v584 = vphi 0, %v1680
        %v585 = vphi 0, %v1681
        %v586 = vphi 0, %v1682
        %v587 = vphi 0, %v1683
        %v588 = vphi 0, %v1684
        %v589 = vphi 0, %v1685
        %v590 = vphi 0, %v1686
        %v591 = vphi 0, %v1687
        %v592 = vphi 0, %v1688
        %v593 = vphi 0, %v1689
        %v594 = vphi 0, %v1690
        %v595 = vphi 0, %v1691
        %v596 = vphi 0, %v1692
        %v597 = vphi 0, %v1693
      $region43: #{vq_forward.3} parent=39 // loop_header_branch
        %532 = sbr.rel (%p530) target = $region47
      $region44: #{vq_forward.3} parent=39 // loop_body
        %s598 = smul.u32 %s529, 256
        %s599 = sshra.s32 %s598, 7
        %s600 = sand.u32 %s598, 127
        %s601 = smul.addr %s599, 4
        %s602 = scalar_lea.vmem %s3, %s601
        %v603 = vld [vmem:[%s602] sm:$0xff]
        %v604 = vld [vmem:[%s602 + $0x20] sm:$0xff]
        %v605 = vld [vmem:[%s602 + $0x40] sm:$0xff]
        %v606 = vld [vmem:[%s602 + $0x60] sm:$0xff]
        %s607 = scalar_lea.vmem %s4, %s599
        %v608 = vld [vmem:[%s607] sm:$0x3]
        %v610 = vperm.slane %v608, 0
        %v611 = vperm.slane %v608, 1
        %v618 = vunpack.c.l.b16 %v603
        %v619 = vunpack.c.h.b16 %v603
        %v620 = vunpack.c.l.b16 %v604
        %v621 = vunpack.c.h.b16 %v604
        %v622 = vunpack.c.l.b16 %v605
        %v623 = vunpack.c.h.b16 %v605
        %v624 = vunpack.c.l.b16 %v606
        %v625 = vunpack.c.h.b16 %v606
        %v626 = vpack.c.b16 %v620, %v618
        %v627 = vpack.c.b16 %v621, %v619
        %v628 = vpack.c.b16 %v624, %v622
        %v629 = vpack.c.b16 %v625, %v623
        %vm634 = vcmask 261120
        %v636 = vsel %vm634, %v509, 0
        %v639 = vsel %vm634, %v510, 0
        %v642 = vsel %vm634, %v511, 0
        %v645 = vsel %vm634, %v512, 0
        %v648 = vsel %vm634, %v513, 0
        %v651 = vsel %vm634, %v514, 0
        %v654 = vsel %vm634, %v515, 0
        %v657 = vsel %vm634, %v516, 0
        %v660 = vsel %vm634, %v517, 0
        %v663 = vsel %vm634, %v518, 0
        %v666 = vsel %vm634, %v519, 0
        %v669 = vsel %vm634, %v520, 0
        %v672 = vsel %vm634, %v521, 0
        %v675 = vsel %vm634, %v522, 0
        %v678 = vsel %vm634, %v523, 0
        %v681 = vsel %vm634, %v524, 0
        %683 = vmatpush.bf16.msra.mxu0 0
        %684 = vmatpush.bf16.msra.mxu0 0
        %685 = vmatpush.bf16.msra.mxu0 0
        %686 = vmatpush.bf16.msra.mxu0 0
        %687 = vmatpush.bf16.msra.mxu0 0
        %688 = vmatpush.bf16.msra.mxu0 0
        %689 = vmatpush.bf16.msra.mxu0 %v628
        %690 = vmatpush.bf16.msra.mxu0 %v626
        %691 = vmatmul.bf16.gmra.mxu0 %v636
        %v692 = vpop.f32.mrf.mxu0
        %v693 = vadd.f32 %v610, %v692
        %v694 = vpop.f32.mrf.mxu0
        %v695 = vadd.f32 %v610, %v694
        %696 = vmatmul.bf16.gmra.mxu0 %v639
        %v697 = vpop.f32.mrf.mxu0
        %v698 = vadd.f32 %v610, %v697
        %v699 = vpop.f32.mrf.mxu0
        %v700 = vadd.f32 %v610, %v699
        %701 = vmatmul.bf16.gmra.mxu0 %v642
        %v702 = vpop.f32.mrf.mxu0
        %v703 = vadd.f32 %v610, %v702
        %v704 = vpop.f32.mrf.mxu0
        %v705 = vadd.f32 %v610, %v704
        %706 = vmatmul.bf16.gmra.mxu0 %v645
        %v707 = vpop.f32.mrf.mxu0
        %v708 = vadd.f32 %v610, %v707
        %v709 = vpop.f32.mrf.mxu0
        %v710 = vadd.f32 %v610, %v709
        %711 = vmatmul.bf16.gmra.mxu0 %v648
        %v712 = vpop.f32.mrf.mxu0
        %v713 = vadd.f32 %v610, %v712
        %v714 = vpop.f32.mrf.mxu0
        %v715 = vadd.f32 %v610, %v714
        %716 = vmatmul.bf16.gmra.mxu0 %v651
        %v717 = vpop.f32.mrf.mxu0
        %v718 = vadd.f32 %v610, %v717
        %v719 = vpop.f32.mrf.mxu0
        %v720 = vadd.f32 %v610, %v719
        %721 = vmatmul.bf16.gmra.mxu0 %v654
        %v722 = vpop.f32.mrf.mxu0
        %v723 = vadd.f32 %v610, %v722
        %v724 = vpop.f32.mrf.mxu0
        %v725 = vadd.f32 %v610, %v724
        %726 = vmatmul.bf16.gmra.mxu0 %v657
        %v727 = vpop.f32.mrf.mxu0
        %v728 = vadd.f32 %v610, %v727
        %v729 = vpop.f32.mrf.mxu0
        %v730 = vadd.f32 %v610, %v729
        %731 = vmatmul.bf16.gmra.mxu0 %v660
        %v732 = vpop.f32.mrf.mxu0
        %v733 = vadd.f32 %v610, %v732
        %v734 = vpop.f32.mrf.mxu0
        %v735 = vadd.f32 %v610, %v734
        %736 = vmatmul.bf16.gmra.mxu0 %v663
        %v737 = vpop.f32.mrf.mxu0
        %v738 = vadd.f32 %v610, %v737
        %v739 = vpop.f32.mrf.mxu0
        %v740 = vadd.f32 %v610, %v739
        %741 = vmatmul.bf16.gmra.mxu0 %v666
        %v742 = vpop.f32.mrf.mxu0
        %v743 = vadd.f32 %v610, %v742
        %v744 = vpop.f32.mrf.mxu0
        %v745 = vadd.f32 %v610, %v744
        %746 = vmatmul.bf16.gmra.mxu0 %v669
        %v747 = vpop.f32.mrf.mxu0
        %v748 = vadd.f32 %v610, %v747
        %v749 = vpop.f32.mrf.mxu0
        %v750 = vadd.f32 %v610, %v749
        %751 = vmatmul.bf16.gmra.mxu0 %v672
        %v752 = vpop.f32.mrf.mxu0
        %v753 = vadd.f32 %v610, %v752
        %v754 = vpop.f32.mrf.mxu0
        %v755 = vadd.f32 %v610, %v754
        %756 = vmatmul.bf16.gmra.mxu0 %v675
        %v757 = vpop.f32.mrf.mxu0
        %v758 = vadd.f32 %v610, %v757
        %v759 = vpop.f32.mrf.mxu0
        %v760 = vadd.f32 %v610, %v759
        %761 = vmatmul.bf16.gmra.mxu0 %v678
        %v762 = vpop.f32.mrf.mxu0
        %v763 = vadd.f32 %v610, %v762
        %v764 = vpop.f32.mrf.mxu0
        %v765 = vadd.f32 %v610, %v764
        %766 = vmatmul.bf16.gmra.mxu0 %v681
        %v767 = vpop.f32.mrf.mxu0
        %v768 = vadd.f32 %v610, %v767
        %v769 = vpop.f32.mrf.mxu0
        %v770 = vadd.f32 %v610, %v769
        %771 = vdwg.mxu0
        %772 = vmatpush.bf16.msra.mxu0 0
        %773 = vmatpush.bf16.msra.mxu0 0
        %774 = vmatpush.bf16.msra.mxu0 0
        %775 = vmatpush.bf16.msra.mxu0 0
        %776 = vmatpush.bf16.msra.mxu0 0
        %777 = vmatpush.bf16.msra.mxu0 0
        %778 = vmatpush.bf16.msra.mxu0 %v629
        %779 = vmatpush.bf16.msra.mxu0 %v627
        %780 = vmatmul.bf16.gmra.mxu0 %v636
        %v781 = vpop.f32.mrf.mxu0
        %v782 = vadd.f32 %v611, %v781
        %v783 = vpop.f32.mrf.mxu0
        %v784 = vadd.f32 %v611, %v783
        %785 = vmatmul.bf16.gmra.mxu0 %v639
        %v786 = vpop.f32.mrf.mxu0
        %v787 = vadd.f32 %v611, %v786
        %v788 = vpop.f32.mrf.mxu0
        %v789 = vadd.f32 %v611, %v788
        %790 = vmatmul.bf16.gmra.mxu0 %v642
        %v791 = vpop.f32.mrf.mxu0
        %v792 = vadd.f32 %v611, %v791
        %v793 = vpop.f32.mrf.mxu0
        %v794 = vadd.f32 %v611, %v793
        %795 = vmatmul.bf16.gmra.mxu0 %v645
        %v796 = vpop.f32.mrf.mxu0
        %v797 = vadd.f32 %v611, %v796
        %v798 = vpop.f32.mrf.mxu0
        %v799 = vadd.f32 %v611, %v798
        %800 = vmatmul.bf16.gmra.mxu0 %v648
        %v801 = vpop.f32.mrf.mxu0
        %v802 = vadd.f32 %v611, %v801
        %v803 = vpop.f32.mrf.mxu0
        %v804 = vadd.f32 %v611, %v803
        %805 = vmatmul.bf16.gmra.mxu0 %v651
        %v806 = vpop.f32.mrf.mxu0
        %v807 = vadd.f32 %v611, %v806
        %v808 = vpop.f32.mrf.mxu0
        %v809 = vadd.f32 %v611, %v808
        %810 = vmatmul.bf16.gmra.mxu0 %v654
        %v811 = vpop.f32.mrf.mxu0
        %v812 = vadd.f32 %v611, %v811
        %v813 = vpop.f32.mrf.mxu0
        %v814 = vadd.f32 %v611, %v813
        %815 = vmatmul.bf16.gmra.mxu0 %v657
        %v816 = vpop.f32.mrf.mxu0
        %v817 = vadd.f32 %v611, %v816
        %v818 = vpop.f32.mrf.mxu0
        %v819 = vadd.f32 %v611, %v818
        %820 = vmatmul.bf16.gmra.mxu0 %v660
        %v821 = vpop.f32.mrf.mxu0
        %v822 = vadd.f32 %v611, %v821
        %v823 = vpop.f32.mrf.mxu0
        %v824 = vadd.f32 %v611, %v823
        %825 = vmatmul.bf16.gmra.mxu0 %v663
        %v826 = vpop.f32.mrf.mxu0
        %v827 = vadd.f32 %v611, %v826
        %v828 = vpop.f32.mrf.mxu0
        %v829 = vadd.f32 %v611, %v828
        %830 = vmatmul.bf16.gmra.mxu0 %v666
        %v831 = vpop.f32.mrf.mxu0
        %v832 = vadd.f32 %v611, %v831
        %v833 = vpop.f32.mrf.mxu0
        %v834 = vadd.f32 %v611, %v833
        %835 = vmatmul.bf16.gmra.mxu0 %v669
        %v836 = vpop.f32.mrf.mxu0
        %v837 = vadd.f32 %v611, %v836
        %v838 = vpop.f32.mrf.mxu0
        %v839 = vadd.f32 %v611, %v838
        %840 = vmatmul.bf16.gmra.mxu0 %v672
        %v841 = vpop.f32.mrf.mxu0
        %v842 = vadd.f32 %v611, %v841
        %v843 = vpop.f32.mrf.mxu0
        %v844 = vadd.f32 %v611, %v843
        %845 = vmatmul.bf16.gmra.mxu0 %v675
        %v846 = vpop.f32.mrf.mxu0
        %v847 = vadd.f32 %v611, %v846
        %v848 = vpop.f32.mrf.mxu0
        %v849 = vadd.f32 %v611, %v848
        %850 = vmatmul.bf16.gmra.mxu0 %v678
        %v851 = vpop.f32.mrf.mxu0
        %v852 = vadd.f32 %v611, %v851
        %v853 = vpop.f32.mrf.mxu0
        %v854 = vadd.f32 %v611, %v853
        %855 = vmatmul.bf16.gmra.mxu0 %v681
        %v856 = vpop.f32.mrf.mxu0
        %v857 = vadd.f32 %v611, %v856
        %v858 = vpop.f32.mrf.mxu0
        %v859 = vadd.f32 %v611, %v858
        %860 = vdwg.mxu0
        %v861 = vmin.f32 %v693, %v782
        %862 = vmin.xlane.f32.xlu0 %v861
        %v863 = vpop.xlane.xlu0 %862
        %v864 = vmin.f32 %v695, %v784
        %865 = vmin.xlane.f32.xlu0 %v864
        %v866 = vpop.xlane.xlu0 %865
        %v867 = vmin.f32 %v698, %v787
        %868 = vmin.xlane.f32.xlu0 %v867
        %v869 = vpop.xlane.xlu0 %868
        %v870 = vmin.f32 %v700, %v789
        %871 = vmin.xlane.f32.xlu0 %v870
        %v872 = vpop.xlane.xlu0 %871
        %v873 = vmin.f32 %v703, %v792
        %874 = vmin.xlane.f32.xlu0 %v873
        %v875 = vpop.xlane.xlu0 %874
        %v876 = vmin.f32 %v705, %v794
        %877 = vmin.xlane.f32.xlu0 %v876
        %v878 = vpop.xlane.xlu0 %877
        %v879 = vmin.f32 %v708, %v797
        %880 = vmin.xlane.f32.xlu0 %v879
        %v881 = vpop.xlane.xlu0 %880
        %v882 = vmin.f32 %v710, %v799
        %883 = vmin.xlane.f32.xlu0 %v882
        %v884 = vpop.xlane.xlu0 %883
        %v885 = vmin.f32 %v713, %v802
        %886 = vmin.xlane.f32.xlu0 %v885
        %v887 = vpop.xlane.xlu0 %886
        %v888 = vmin.f32 %v715, %v804
        %889 = vmin.xlane.f32.xlu0 %v888
        %v890 = vpop.xlane.xlu0 %889
        %v891 = vmin.f32 %v718, %v807
        %892 = vmin.xlane.f32.xlu0 %v891
        %v893 = vpop.xlane.xlu0 %892
        %v894 = vmin.f32 %v720, %v809
        %895 = vmin.xlane.f32.xlu0 %v894
        %v896 = vpop.xlane.xlu0 %895
        %v897 = vmin.f32 %v723, %v812
        %898 = vmin.xlane.f32.xlu0 %v897
        %v899 = vpop.xlane.xlu0 %898
        %v900 = vmin.f32 %v725, %v814
        %901 = vmin.xlane.f32.xlu0 %v900
        %v902 = vpop.xlane.xlu0 %901
        %v903 = vmin.f32 %v728, %v817
        %904 = vmin.xlane.f32.xlu0 %v903
        %v905 = vpop.xlane.xlu0 %904
        %v906 = vmin.f32 %v730, %v819
        %907 = vmin.xlane.f32.xlu0 %v906
        %v908 = vpop.xlane.xlu0 %907
        %v909 = vmin.f32 %v733, %v822
        %910 = vmin.xlane.f32.xlu0 %v909
        %v911 = vpop.xlane.xlu0 %910
        %v912 = vmin.f32 %v735, %v824
        %913 = vmin.xlane.f32.xlu0 %v912
        %v914 = vpop.xlane.xlu0 %913
        %v915 = vmin.f32 %v738, %v827
        %916 = vmin.xlane.f32.xlu0 %v915
        %v917 = vpop.xlane.xlu0 %916
        %v918 = vmin.f32 %v740, %v829
        %919 = vmin.xlane.f32.xlu0 %v918
        %v920 = vpop.xlane.xlu0 %919
        %v921 = vmin.f32 %v743, %v832
        %922 = vmin.xlane.f32.xlu0 %v921
        %v923 = vpop.xlane.xlu0 %922
        %v924 = vmin.f32 %v745, %v834
        %925 = vmin.xlane.f32.xlu0 %v924
        %v926 = vpop.xlane.xlu0 %925
        %v927 = vmin.f32 %v748, %v837
        %928 = vmin.xlane.f32.xlu0 %v927
        %v929 = vpop.xlane.xlu0 %928
        %v930 = vmin.f32 %v750, %v839
        %931 = vmin.xlane.f32.xlu0 %v930
        %v932 = vpop.xlane.xlu0 %931
        %v933 = vmin.f32 %v753, %v842
        %934 = vmin.xlane.f32.xlu0 %v933
        %v935 = vpop.xlane.xlu0 %934
        %v936 = vmin.f32 %v755, %v844
        %937 = vmin.xlane.f32.xlu0 %v936
        %v938 = vpop.xlane.xlu0 %937
        %v939 = vmin.f32 %v758, %v847
        %940 = vmin.xlane.f32.xlu0 %v939
        %v941 = vpop.xlane.xlu0 %940
        %v942 = vmin.f32 %v760, %v849
        %943 = vmin.xlane.f32.xlu0 %v942
        %v944 = vpop.xlane.xlu0 %943
        %v945 = vmin.f32 %v763, %v852
        %946 = vmin.xlane.f32.xlu0 %v945
        %v947 = vpop.xlane.xlu0 %946
        %v948 = vmin.f32 %v765, %v854
        %949 = vmin.xlane.f32.xlu0 %v948
        %v950 = vpop.xlane.xlu0 %949
        %v951 = vmin.f32 %v768, %v857
        %952 = vmin.xlane.f32.xlu0 %v951
        %v953 = vpop.xlane.xlu0 %952
        %v954 = vmin.f32 %v770, %v859
        %955 = vmin.xlane.f32.xlu0 %v954
        %v956 = vpop.xlane.xlu0 %955
        %vm957 = vcmp.eq.f32.partialorder %v693, %v863
        %vm958 = vcmp.eq.f32.partialorder %v782, %v863
        %vm959 = vcmp.eq.f32.partialorder %v695, %v866
        %vm960 = vcmp.eq.f32.partialorder %v784, %v866
        %vm961 = vcmp.eq.f32.partialorder %v698, %v869
        %vm962 = vcmp.eq.f32.partialorder %v787, %v869
        %vm963 = vcmp.eq.f32.partialorder %v700, %v872
        %vm964 = vcmp.eq.f32.partialorder %v789, %v872
        %vm965 = vcmp.eq.f32.partialorder %v703, %v875
        %vm966 = vcmp.eq.f32.partialorder %v792, %v875
        %vm967 = vcmp.eq.f32.partialorder %v705, %v878
        %vm968 = vcmp.eq.f32.partialorder %v794, %v878
        %vm969 = vcmp.eq.f32.partialorder %v708, %v881
        %vm970 = vcmp.eq.f32.partialorder %v797, %v881
        %vm971 = vcmp.eq.f32.partialorder %v710, %v884
        %vm972 = vcmp.eq.f32.partialorder %v799, %v884
        %vm973 = vcmp.eq.f32.partialorder %v713, %v887
        %vm974 = vcmp.eq.f32.partialorder %v802, %v887
        %vm975 = vcmp.eq.f32.partialorder %v715, %v890
        %vm976 = vcmp.eq.f32.partialorder %v804, %v890
        %vm977 = vcmp.eq.f32.partialorder %v718, %v893
        %vm978 = vcmp.eq.f32.partialorder %v807, %v893
        %vm979 = vcmp.eq.f32.partialorder %v720, %v896
        %vm980 = vcmp.eq.f32.partialorder %v809, %v896
        %vm981 = vcmp.eq.f32.partialorder %v723, %v899
        %vm982 = vcmp.eq.f32.partialorder %v812, %v899
        %vm983 = vcmp.eq.f32.partialorder %v725, %v902
        %vm984 = vcmp.eq.f32.partialorder %v814, %v902
        %vm985 = vcmp.eq.f32.partialorder %v728, %v905
        %vm986 = vcmp.eq.f32.partialorder %v817, %v905
        %vm987 = vcmp.eq.f32.partialorder %v730, %v908
        %vm988 = vcmp.eq.f32.partialorder %v819, %v908
        %vm989 = vcmp.eq.f32.partialorder %v733, %v911
        %vm990 = vcmp.eq.f32.partialorder %v822, %v911
        %vm991 = vcmp.eq.f32.partialorder %v735, %v914
        %vm992 = vcmp.eq.f32.partialorder %v824, %v914
        %vm993 = vcmp.eq.f32.partialorder %v738, %v917
        %vm994 = vcmp.eq.f32.partialorder %v827, %v917
        %vm995 = vcmp.eq.f32.partialorder %v740, %v920
        %vm996 = vcmp.eq.f32.partialorder %v829, %v920
        %vm997 = vcmp.eq.f32.partialorder %v743, %v923
        %vm998 = vcmp.eq.f32.partialorder %v832, %v923
        %vm999 = vcmp.eq.f32.partialorder %v745, %v926
        %vm1000 = vcmp.eq.f32.partialorder %v834, %v926
        %vm1001 = vcmp.eq.f32.partialorder %v748, %v929
        %vm1002 = vcmp.eq.f32.partialorder %v837, %v929
        %vm1003 = vcmp.eq.f32.partialorder %v750, %v932
        %vm1004 = vcmp.eq.f32.partialorder %v839, %v932
        %vm1005 = vcmp.eq.f32.partialorder %v753, %v935
        %vm1006 = vcmp.eq.f32.partialorder %v842, %v935
        %vm1007 = vcmp.eq.f32.partialorder %v755, %v938
        %vm1008 = vcmp.eq.f32.partialorder %v844, %v938
        %vm1009 = vcmp.eq.f32.partialorder %v758, %v941
        %vm1010 = vcmp.eq.f32.partialorder %v847, %v941
        %vm1011 = vcmp.eq.f32.partialorder %v760, %v944
        %vm1012 = vcmp.eq.f32.partialorder %v849, %v944
        %vm1013 = vcmp.eq.f32.partialorder %v763, %v947
        %vm1014 = vcmp.eq.f32.partialorder %v852, %v947
        %vm1015 = vcmp.eq.f32.partialorder %v765, %v950
        %vm1016 = vcmp.eq.f32.partialorder %v854, %v950
        %vm1017 = vcmp.eq.f32.partialorder %v768, %v953
        %vm1018 = vcmp.eq.f32.partialorder %v857, %v953
        %vm1019 = vcmp.eq.f32.partialorder %v770, %v956
        %vm1020 = vcmp.eq.f32.partialorder %v859, %v956
        %v1021 = vsel %vm957, %v526, 256
        %v1022 = vsel %vm958, %v527, 256
        %v1023 = vsel %vm959, %v526, 256
        %v1024 = vsel %vm960, %v527, 256
        %v1025 = vsel %vm961, %v526, 256
        %v1026 = vsel %vm962, %v527, 256
        %v1027 = vsel %vm963, %v526, 256
        %v1028 = vsel %vm964, %v527, 256
        %v1029 = vsel %vm965, %v526, 256
        %v1030 = vsel %vm966, %v527, 256
        %v1031 = vsel %vm967, %v526, 256
        %v1032 = vsel %vm968, %v527, 256
        %v1033 = vsel %vm969, %v526, 256
        %v1034 = vsel %vm970, %v527, 256
        %v1035 = vsel %vm971, %v526, 256
        %v1036 = vsel %vm972, %v527, 256
        %v1037 = vsel %vm973, %v526, 256
        %v1038 = vsel %vm974, %v527, 256
        %v1039 = vsel %vm975, %v526, 256
        %v1040 = vsel %vm976, %v527, 256
        %v1041 = vsel %vm977, %v526, 256
        %v1042 = vsel %vm978, %v527, 256
        %v1043 = vsel %vm979, %v526, 256
        %v1044 = vsel %vm980, %v527, 256
        %v1045 = vsel %vm981, %v526, 256
        %v1046 = vsel %vm982, %v527, 256
        %v1047 = vsel %vm983, %v526, 256
        %v1048 = vsel %vm984, %v527, 256
        %v1049 = vsel %vm985, %v526, 256
        %v1050 = vsel %vm986, %v527, 256
        %v1051 = vsel %vm987, %v526, 256
        %v1052 = vsel %vm988, %v527, 256
        %v1053 = vsel %vm989, %v526, 256
        %v1054 = vsel %vm990, %v527, 256
        %v1055 = vsel %vm991, %v526, 256
        %v1056 = vsel %vm992, %v527, 256
        %v1057 = vsel %vm993, %v526, 256
        %v1058 = vsel %vm994, %v527, 256
        %v1059 = vsel %vm995, %v526, 256
        %v1060 = vsel %vm996, %v527, 256
        %v1061 = vsel %vm997, %v526, 256
        %v1062 = vsel %vm998, %v527, 256
        %v1063 = vsel %vm999, %v526, 256
        %v1064 = vsel %vm1000, %v527, 256
        %v1065 = vsel %vm1001, %v526, 256
        %v1066 = vsel %vm1002, %v527, 256
        %v1067 = vsel %vm1003, %v526, 256
        %v1068 = vsel %vm1004, %v527, 256
        %v1069 = vsel %vm1005, %v526, 256
        %v1070 = vsel %vm1006, %v527, 256
        %v1071 = vsel %vm1007, %v526, 256
        %v1072 = vsel %vm1008, %v527, 256
        %v1073 = vsel %vm1009, %v526, 256
        %v1074 = vsel %vm1010, %v527, 256
        %v1075 = vsel %vm1011, %v526, 256
        %v1076 = vsel %vm1012, %v527, 256
        %v1077 = vsel %vm1013, %v526, 256
        %v1078 = vsel %vm1014, %v527, 256
        %v1079 = vsel %vm1015, %v526, 256
        %v1080 = vsel %vm1016, %v527, 256
        %v1081 = vsel %vm1017, %v526, 256
        %v1082 = vsel %vm1018, %v527, 256
        %v1083 = vsel %vm1019, %v526, 256
        %v1084 = vsel %vm1020, %v527, 256
        %vm1085 = vcmp.lt.s32.totalorder %v1021, %v1022
        %v1086 = vsel %vm1085, %v1021, %v1022
        %v1087 = vand.u32 %v1086, 65535
        %v1088 = vshra.s32 %v1086, 16
        %v1089 = vcvt.s32.f32 %v1087
        %v1090 = vcvt.s32.f32 %v1088
        %1091 = vmin.xlane.f32.xlu0 %v1090
        %v1092 = vpop.xlane.xlu0 %1091
        %vm1093 = vcmp.eq.f32.partialorder %v1090, %v1092
        %v1094 = vsel %vm1093, %v1089, inf
        %1095 = vmin.xlane.f32.xlu0 %v1094
        %v1096 = vpop.xlane.xlu0 %1095
        %v1097 = vcvt.f32.s32 %v1096
        %v1098 = vcvt.f32.s32 %v1092
        %v1099 = vshll.u32 %v1098, 16
        %v1100 = vadd.s32 %v1099, %v1097
        %vm1101 = vcmp.lt.s32.totalorder %v1023, %v1024
        %v1102 = vsel %vm1101, %v1023, %v1024
        %v1103 = vand.u32 %v1102, 65535
        %v1104 = vshra.s32 %v1102, 16
        %v1105 = vcvt.s32.f32 %v1103
        %v1106 = vcvt.s32.f32 %v1104
        %1107 = vmin.xlane.f32.xlu0 %v1106
        %v1108 = vpop.xlane.xlu0 %1107
        %vm1109 = vcmp.eq.f32.partialorder %v1106, %v1108
        %v1110 = vsel %vm1109, %v1105, inf
        %1111 = vmin.xlane.f32.xlu0 %v1110
        %v1112 = vpop.xlane.xlu0 %1111
        %v1113 = vcvt.f32.s32 %v1112
        %v1114 = vcvt.f32.s32 %v1108
        %v1115 = vshll.u32 %v1114, 16
        %v1116 = vadd.s32 %v1115, %v1113
        %vm1117 = vcmp.lt.s32.totalorder %v1025, %v1026
        %v1118 = vsel %vm1117, %v1025, %v1026
        %v1119 = vand.u32 %v1118, 65535
        %v1120 = vshra.s32 %v1118, 16
        %v1121 = vcvt.s32.f32 %v1119
        %v1122 = vcvt.s32.f32 %v1120
        %1123 = vmin.xlane.f32.xlu0 %v1122
        %v1124 = vpop.xlane.xlu0 %1123
        %vm1125 = vcmp.eq.f32.partialorder %v1122, %v1124
        %v1126 = vsel %vm1125, %v1121, inf
        %1127 = vmin.xlane.f32.xlu0 %v1126
        %v1128 = vpop.xlane.xlu0 %1127
        %v1129 = vcvt.f32.s32 %v1128
        %v1130 = vcvt.f32.s32 %v1124
        %v1131 = vshll.u32 %v1130, 16
        %v1132 = vadd.s32 %v1131, %v1129
        %vm1133 = vcmp.lt.s32.totalorder %v1027, %v1028
        %v1134 = vsel %vm1133, %v1027, %v1028
        %v1135 = vand.u32 %v1134, 65535
        %v1136 = vshra.s32 %v1134, 16
        %v1137 = vcvt.s32.f32 %v1135
        %v1138 = vcvt.s32.f32 %v1136
        %1139 = vmin.xlane.f32.xlu0 %v1138
        %v1140 = vpop.xlane.xlu0 %1139
        %vm1141 = vcmp.eq.f32.partialorder %v1138, %v1140
        %v1142 = vsel %vm1141, %v1137, inf
        %1143 = vmin.xlane.f32.xlu0 %v1142
        %v1144 = vpop.xlane.xlu0 %1143
        %v1145 = vcvt.f32.s32 %v1144
        %v1146 = vcvt.f32.s32 %v1140
        %v1147 = vshll.u32 %v1146, 16
        %v1148 = vadd.s32 %v1147, %v1145
        %vm1149 = vcmp.lt.s32.totalorder %v1029, %v1030
        %v1150 = vsel %vm1149, %v1029, %v1030
        %v1151 = vand.u32 %v1150, 65535
        %v1152 = vshra.s32 %v1150, 16
        %v1153 = vcvt.s32.f32 %v1151
        %v1154 = vcvt.s32.f32 %v1152
        %1155 = vmin.xlane.f32.xlu0 %v1154
        %v1156 = vpop.xlane.xlu0 %1155
        %vm1157 = vcmp.eq.f32.partialorder %v1154, %v1156
        %v1158 = vsel %vm1157, %v1153, inf
        %1159 = vmin.xlane.f32.xlu0 %v1158
        %v1160 = vpop.xlane.xlu0 %1159
        %v1161 = vcvt.f32.s32 %v1160
        %v1162 = vcvt.f32.s32 %v1156
        %v1163 = vshll.u32 %v1162, 16
        %v1164 = vadd.s32 %v1163, %v1161
        %vm1165 = vcmp.lt.s32.totalorder %v1031, %v1032
        %v1166 = vsel %vm1165, %v1031, %v1032
        %v1167 = vand.u32 %v1166, 65535
        %v1168 = vshra.s32 %v1166, 16
        %v1169 = vcvt.s32.f32 %v1167
        %v1170 = vcvt.s32.f32 %v1168
        %1171 = vmin.xlane.f32.xlu0 %v1170
        %v1172 = vpop.xlane.xlu0 %1171
        %vm1173 = vcmp.eq.f32.partialorder %v1170, %v1172
        %v1174 = vsel %vm1173, %v1169, inf
        %1175 = vmin.xlane.f32.xlu0 %v1174
        %v1176 = vpop.xlane.xlu0 %1175
        %v1177 = vcvt.f32.s32 %v1176
        %v1178 = vcvt.f32.s32 %v1172
        %v1179 = vshll.u32 %v1178, 16
        %v1180 = vadd.s32 %v1179, %v1177
        %vm1181 = vcmp.lt.s32.totalorder %v1033, %v1034
        %v1182 = vsel %vm1181, %v1033, %v1034
        %v1183 = vand.u32 %v1182, 65535
        %v1184 = vshra.s32 %v1182, 16
        %v1185 = vcvt.s32.f32 %v1183
        %v1186 = vcvt.s32.f32 %v1184
        %1187 = vmin.xlane.f32.xlu0 %v1186
        %v1188 = vpop.xlane.xlu0 %1187
        %vm1189 = vcmp.eq.f32.partialorder %v1186, %v1188
        %v1190 = vsel %vm1189, %v1185, inf
        %1191 = vmin.xlane.f32.xlu0 %v1190
        %v1192 = vpop.xlane.xlu0 %1191
        %v1193 = vcvt.f32.s32 %v1192
        %v1194 = vcvt.f32.s32 %v1188
        %v1195 = vshll.u32 %v1194, 16
        %v1196 = vadd.s32 %v1195, %v1193
        %vm1197 = vcmp.lt.s32.totalorder %v1035, %v1036
        %v1198 = vsel %vm1197, %v1035, %v1036
        %v1199 = vand.u32 %v1198, 65535
        %v1200 = vshra.s32 %v1198, 16
        %v1201 = vcvt.s32.f32 %v1199
        %v1202 = vcvt.s32.f32 %v1200
        %1203 = vmin.xlane.f32.xlu0 %v1202
        %v1204 = vpop.xlane.xlu0 %1203
        %vm1205 = vcmp.eq.f32.partialorder %v1202, %v1204
        %v1206 = vsel %vm1205, %v1201, inf
        %1207 = vmin.xlane.f32.xlu0 %v1206
        %v1208 = vpop.xlane.xlu0 %1207
        %v1209 = vcvt.f32.s32 %v1208
        %v1210 = vcvt.f32.s32 %v1204
        %v1211 = vshll.u32 %v1210, 16
        %v1212 = vadd.s32 %v1211, %v1209
        %vm1213 = vcmp.lt.s32.totalorder %v1037, %v1038
        %v1214 = vsel %vm1213, %v1037, %v1038
        %v1215 = vand.u32 %v1214, 65535
        %v1216 = vshra.s32 %v1214, 16
        %v1217 = vcvt.s32.f32 %v1215
        %v1218 = vcvt.s32.f32 %v1216
        %1219 = vmin.xlane.f32.xlu0 %v1218
        %v1220 = vpop.xlane.xlu0 %1219
        %vm1221 = vcmp.eq.f32.partialorder %v1218, %v1220
        %v1222 = vsel %vm1221, %v1217, inf
        %1223 = vmin.xlane.f32.xlu0 %v1222
        %v1224 = vpop.xlane.xlu0 %1223
        %v1225 = vcvt.f32.s32 %v1224
        %v1226 = vcvt.f32.s32 %v1220
        %v1227 = vshll.u32 %v1226, 16
        %v1228 = vadd.s32 %v1227, %v1225
        %vm1229 = vcmp.lt.s32.totalorder %v1039, %v1040
        %v1230 = vsel %vm1229, %v1039, %v1040
        %v1231 = vand.u32 %v1230, 65535
        %v1232 = vshra.s32 %v1230, 16
        %v1233 = vcvt.s32.f32 %v1231
        %v1234 = vcvt.s32.f32 %v1232
        %1235 = vmin.xlane.f32.xlu0 %v1234
        %v1236 = vpop.xlane.xlu0 %1235
        %vm1237 = vcmp.eq.f32.partialorder %v1234, %v1236
        %v1238 = vsel %vm1237, %v1233, inf
        %1239 = vmin.xlane.f32.xlu0 %v1238
        %v1240 = vpop.xlane.xlu0 %1239
        %v1241 = vcvt.f32.s32 %v1240
        %v1242 = vcvt.f32.s32 %v1236
        %v1243 = vshll.u32 %v1242, 16
        %v1244 = vadd.s32 %v1243, %v1241
        %vm1245 = vcmp.lt.s32.totalorder %v1041, %v1042
        %v1246 = vsel %vm1245, %v1041, %v1042
        %v1247 = vand.u32 %v1246, 65535
        %v1248 = vshra.s32 %v1246, 16
        %v1249 = vcvt.s32.f32 %v1247
        %v1250 = vcvt.s32.f32 %v1248
        %1251 = vmin.xlane.f32.xlu0 %v1250
        %v1252 = vpop.xlane.xlu0 %1251
        %vm1253 = vcmp.eq.f32.partialorder %v1250, %v1252
        %v1254 = vsel %vm1253, %v1249, inf
        %1255 = vmin.xlane.f32.xlu0 %v1254
        %v1256 = vpop.xlane.xlu0 %1255
        %v1257 = vcvt.f32.s32 %v1256
        %v1258 = vcvt.f32.s32 %v1252
        %v1259 = vshll.u32 %v1258, 16
        %v1260 = vadd.s32 %v1259, %v1257
        %vm1261 = vcmp.lt.s32.totalorder %v1043, %v1044
        %v1262 = vsel %vm1261, %v1043, %v1044
        %v1263 = vand.u32 %v1262, 65535
        %v1264 = vshra.s32 %v1262, 16
        %v1265 = vcvt.s32.f32 %v1263
        %v1266 = vcvt.s32.f32 %v1264
        %1267 = vmin.xlane.f32.xlu0 %v1266
        %v1268 = vpop.xlane.xlu0 %1267
        %vm1269 = vcmp.eq.f32.partialorder %v1266, %v1268
        %v1270 = vsel %vm1269, %v1265, inf
        %1271 = vmin.xlane.f32.xlu0 %v1270
        %v1272 = vpop.xlane.xlu0 %1271
        %v1273 = vcvt.f32.s32 %v1272
        %v1274 = vcvt.f32.s32 %v1268
        %v1275 = vshll.u32 %v1274, 16
        %v1276 = vadd.s32 %v1275, %v1273
        %vm1277 = vcmp.lt.s32.totalorder %v1045, %v1046
        %v1278 = vsel %vm1277, %v1045, %v1046
        %v1279 = vand.u32 %v1278, 65535
        %v1280 = vshra.s32 %v1278, 16
        %v1281 = vcvt.s32.f32 %v1279
        %v1282 = vcvt.s32.f32 %v1280
        %1283 = vmin.xlane.f32.xlu0 %v1282
        %v1284 = vpop.xlane.xlu0 %1283
        %vm1285 = vcmp.eq.f32.partialorder %v1282, %v1284
        %v1286 = vsel %vm1285, %v1281, inf
        %1287 = vmin.xlane.f32.xlu0 %v1286
        %v1288 = vpop.xlane.xlu0 %1287
        %v1289 = vcvt.f32.s32 %v1288
        %v1290 = vcvt.f32.s32 %v1284
        %v1291 = vshll.u32 %v1290, 16
        %v1292 = vadd.s32 %v1291, %v1289
        %vm1293 = vcmp.lt.s32.totalorder %v1047, %v1048
        %v1294 = vsel %vm1293, %v1047, %v1048
        %v1295 = vand.u32 %v1294, 65535
        %v1296 = vshra.s32 %v1294, 16
        %v1297 = vcvt.s32.f32 %v1295
        %v1298 = vcvt.s32.f32 %v1296
        %1299 = vmin.xlane.f32.xlu0 %v1298
        %v1300 = vpop.xlane.xlu0 %1299
        %vm1301 = vcmp.eq.f32.partialorder %v1298, %v1300
        %v1302 = vsel %vm1301, %v1297, inf
        %1303 = vmin.xlane.f32.xlu0 %v1302
        %v1304 = vpop.xlane.xlu0 %1303
        %v1305 = vcvt.f32.s32 %v1304
        %v1306 = vcvt.f32.s32 %v1300
        %v1307 = vshll.u32 %v1306, 16
        %v1308 = vadd.s32 %v1307, %v1305
        %vm1309 = vcmp.lt.s32.totalorder %v1049, %v1050
        %v1310 = vsel %vm1309, %v1049, %v1050
        %v1311 = vand.u32 %v1310, 65535
        %v1312 = vshra.s32 %v1310, 16
        %v1313 = vcvt.s32.f32 %v1311
        %v1314 = vcvt.s32.f32 %v1312
        %1315 = vmin.xlane.f32.xlu0 %v1314
        %v1316 = vpop.xlane.xlu0 %1315
        %vm1317 = vcmp.eq.f32.partialorder %v1314, %v1316
        %v1318 = vsel %vm1317, %v1313, inf
        %1319 = vmin.xlane.f32.xlu0 %v1318
        %v1320 = vpop.xlane.xlu0 %1319
        %v1321 = vcvt.f32.s32 %v1320
        %v1322 = vcvt.f32.s32 %v1316
        %v1323 = vshll.u32 %v1322, 16
        %v1324 = vadd.s32 %v1323, %v1321
        %vm1325 = vcmp.lt.s32.totalorder %v1051, %v1052
        %v1326 = vsel %vm1325, %v1051, %v1052
        %v1327 = vand.u32 %v1326, 65535
        %v1328 = vshra.s32 %v1326, 16
        %v1329 = vcvt.s32.f32 %v1327
        %v1330 = vcvt.s32.f32 %v1328
        %1331 = vmin.xlane.f32.xlu0 %v1330
        %v1332 = vpop.xlane.xlu0 %1331
        %vm1333 = vcmp.eq.f32.partialorder %v1330, %v1332
        %v1334 = vsel %vm1333, %v1329, inf
        %1335 = vmin.xlane.f32.xlu0 %v1334
        %v1336 = vpop.xlane.xlu0 %1335
        %v1337 = vcvt.f32.s32 %v1336
        %v1338 = vcvt.f32.s32 %v1332
        %v1339 = vshll.u32 %v1338, 16
        %v1340 = vadd.s32 %v1339, %v1337
        %vm1341 = vcmp.lt.s32.totalorder %v1053, %v1054
        %v1342 = vsel %vm1341, %v1053, %v1054
        %v1343 = vand.u32 %v1342, 65535
        %v1344 = vshra.s32 %v1342, 16
        %v1345 = vcvt.s32.f32 %v1343
        %v1346 = vcvt.s32.f32 %v1344
        %1347 = vmin.xlane.f32.xlu0 %v1346
        %v1348 = vpop.xlane.xlu0 %1347
        %vm1349 = vcmp.eq.f32.partialorder %v1346, %v1348
        %v1350 = vsel %vm1349, %v1345, inf
        %1351 = vmin.xlane.f32.xlu0 %v1350
        %v1352 = vpop.xlane.xlu0 %1351
        %v1353 = vcvt.f32.s32 %v1352
        %v1354 = vcvt.f32.s32 %v1348
        %v1355 = vshll.u32 %v1354, 16
        %v1356 = vadd.s32 %v1355, %v1353
        %vm1357 = vcmp.lt.s32.totalorder %v1055, %v1056
        %v1358 = vsel %vm1357, %v1055, %v1056
        %v1359 = vand.u32 %v1358, 65535
        %v1360 = vshra.s32 %v1358, 16
        %v1361 = vcvt.s32.f32 %v1359
        %v1362 = vcvt.s32.f32 %v1360
        %1363 = vmin.xlane.f32.xlu0 %v1362
        %v1364 = vpop.xlane.xlu0 %1363
        %vm1365 = vcmp.eq.f32.partialorder %v1362, %v1364
        %v1366 = vsel %vm1365, %v1361, inf
        %1367 = vmin.xlane.f32.xlu0 %v1366
        %v1368 = vpop.xlane.xlu0 %1367
        %v1369 = vcvt.f32.s32 %v1368
        %v1370 = vcvt.f32.s32 %v1364
        %v1371 = vshll.u32 %v1370, 16
        %v1372 = vadd.s32 %v1371, %v1369
        %vm1373 = vcmp.lt.s32.totalorder %v1057, %v1058
        %v1374 = vsel %vm1373, %v1057, %v1058
        %v1375 = vand.u32 %v1374, 65535
        %v1376 = vshra.s32 %v1374, 16
        %v1377 = vcvt.s32.f32 %v1375
        %v1378 = vcvt.s32.f32 %v1376
        %1379 = vmin.xlane.f32.xlu0 %v1378
        %v1380 = vpop.xlane.xlu0 %1379
        %vm1381 = vcmp.eq.f32.partialorder %v1378, %v1380
        %v1382 = vsel %vm1381, %v1377, inf
        %1383 = vmin.xlane.f32.xlu0 %v1382
        %v1384 = vpop.xlane.xlu0 %1383
        %v1385 = vcvt.f32.s32 %v1384
        %v1386 = vcvt.f32.s32 %v1380
        %v1387 = vshll.u32 %v1386, 16
        %v1388 = vadd.s32 %v1387, %v1385
        %vm1389 = vcmp.lt.s32.totalorder %v1059, %v1060
        %v1390 = vsel %vm1389, %v1059, %v1060
        %v1391 = vand.u32 %v1390, 65535
        %v1392 = vshra.s32 %v1390, 16
        %v1393 = vcvt.s32.f32 %v1391
        %v1394 = vcvt.s32.f32 %v1392
        %1395 = vmin.xlane.f32.xlu0 %v1394
        %v1396 = vpop.xlane.xlu0 %1395
        %vm1397 = vcmp.eq.f32.partialorder %v1394, %v1396
        %v1398 = vsel %vm1397, %v1393, inf
        %1399 = vmin.xlane.f32.xlu0 %v1398
        %v1400 = vpop.xlane.xlu0 %1399
        %v1401 = vcvt.f32.s32 %v1400
        %v1402 = vcvt.f32.s32 %v1396
        %v1403 = vshll.u32 %v1402, 16
        %v1404 = vadd.s32 %v1403, %v1401
        %vm1405 = vcmp.lt.s32.totalorder %v1061, %v1062
        %v1406 = vsel %vm1405, %v1061, %v1062
        %v1407 = vand.u32 %v1406, 65535
        %v1408 = vshra.s32 %v1406, 16
        %v1409 = vcvt.s32.f32 %v1407
        %v1410 = vcvt.s32.f32 %v1408
        %1411 = vmin.xlane.f32.xlu0 %v1410
        %v1412 = vpop.xlane.xlu0 %1411
        %vm1413 = vcmp.eq.f32.partialorder %v1410, %v1412
        %v1414 = vsel %vm1413, %v1409, inf
        %1415 = vmin.xlane.f32.xlu0 %v1414
        %v1416 = vpop.xlane.xlu0 %1415
        %v1417 = vcvt.f32.s32 %v1416
        %v1418 = vcvt.f32.s32 %v1412
        %v1419 = vshll.u32 %v1418, 16
        %v1420 = vadd.s32 %v1419, %v1417
        %vm1421 = vcmp.lt.s32.totalorder %v1063, %v1064
        %v1422 = vsel %vm1421, %v1063, %v1064
        %v1423 = vand.u32 %v1422, 65535
        %v1424 = vshra.s32 %v1422, 16
        %v1425 = vcvt.s32.f32 %v1423
        %v1426 = vcvt.s32.f32 %v1424
        %1427 = vmin.xlane.f32.xlu0 %v1426
        %v1428 = vpop.xlane.xlu0 %1427
        %vm1429 = vcmp.eq.f32.partialorder %v1426, %v1428
        %v1430 = vsel %vm1429, %v1425, inf
        %1431 = vmin.xlane.f32.xlu0 %v1430
        %v1432 = vpop.xlane.xlu0 %1431
        %v1433 = vcvt.f32.s32 %v1432
        %v1434 = vcvt.f32.s32 %v1428
        %v1435 = vshll.u32 %v1434, 16
        %v1436 = vadd.s32 %v1435, %v1433
        %vm1437 = vcmp.lt.s32.totalorder %v1065, %v1066
        %v1438 = vsel %vm1437, %v1065, %v1066
        %v1439 = vand.u32 %v1438, 65535
        %v1440 = vshra.s32 %v1438, 16
        %v1441 = vcvt.s32.f32 %v1439
        %v1442 = vcvt.s32.f32 %v1440
        %1443 = vmin.xlane.f32.xlu0 %v1442
        %v1444 = vpop.xlane.xlu0 %1443
        %vm1445 = vcmp.eq.f32.partialorder %v1442, %v1444
        %v1446 = vsel %vm1445, %v1441, inf
        %1447 = vmin.xlane.f32.xlu0 %v1446
        %v1448 = vpop.xlane.xlu0 %1447
        %v1449 = vcvt.f32.s32 %v1448
        %v1450 = vcvt.f32.s32 %v1444
        %v1451 = vshll.u32 %v1450, 16
        %v1452 = vadd.s32 %v1451, %v1449
        %vm1453 = vcmp.lt.s32.totalorder %v1067, %v1068
        %v1454 = vsel %vm1453, %v1067, %v1068
        %v1455 = vand.u32 %v1454, 65535
        %v1456 = vshra.s32 %v1454, 16
        %v1457 = vcvt.s32.f32 %v1455
        %v1458 = vcvt.s32.f32 %v1456
        %1459 = vmin.xlane.f32.xlu0 %v1458
        %v1460 = vpop.xlane.xlu0 %1459
        %vm1461 = vcmp.eq.f32.partialorder %v1458, %v1460
        %v1462 = vsel %vm1461, %v1457, inf
        %1463 = vmin.xlane.f32.xlu0 %v1462
        %v1464 = vpop.xlane.xlu0 %1463
        %v1465 = vcvt.f32.s32 %v1464
        %v1466 = vcvt.f32.s32 %v1460
        %v1467 = vshll.u32 %v1466, 16
        %v1468 = vadd.s32 %v1467, %v1465
        %vm1469 = vcmp.lt.s32.totalorder %v1069, %v1070
        %v1470 = vsel %vm1469, %v1069, %v1070
        %v1471 = vand.u32 %v1470, 65535
        %v1472 = vshra.s32 %v1470, 16
        %v1473 = vcvt.s32.f32 %v1471
        %v1474 = vcvt.s32.f32 %v1472
        %1475 = vmin.xlane.f32.xlu0 %v1474
        %v1476 = vpop.xlane.xlu0 %1475
        %vm1477 = vcmp.eq.f32.partialorder %v1474, %v1476
        %v1478 = vsel %vm1477, %v1473, inf
        %1479 = vmin.xlane.f32.xlu0 %v1478
        %v1480 = vpop.xlane.xlu0 %1479
        %v1481 = vcvt.f32.s32 %v1480
        %v1482 = vcvt.f32.s32 %v1476
        %v1483 = vshll.u32 %v1482, 16
        %v1484 = vadd.s32 %v1483, %v1481
        %vm1485 = vcmp.lt.s32.totalorder %v1071, %v1072
        %v1486 = vsel %vm1485, %v1071, %v1072
        %v1487 = vand.u32 %v1486, 65535
        %v1488 = vshra.s32 %v1486, 16
        %v1489 = vcvt.s32.f32 %v1487
        %v1490 = vcvt.s32.f32 %v1488
        %1491 = vmin.xlane.f32.xlu0 %v1490
        %v1492 = vpop.xlane.xlu0 %1491
        %vm1493 = vcmp.eq.f32.partialorder %v1490, %v1492
        %v1494 = vsel %vm1493, %v1489, inf
        %1495 = vmin.xlane.f32.xlu0 %v1494
        %v1496 = vpop.xlane.xlu0 %1495
        %v1497 = vcvt.f32.s32 %v1496
        %v1498 = vcvt.f32.s32 %v1492
        %v1499 = vshll.u32 %v1498, 16
        %v1500 = vadd.s32 %v1499, %v1497
        %vm1501 = vcmp.lt.s32.totalorder %v1073, %v1074
        %v1502 = vsel %vm1501, %v1073, %v1074
        %v1503 = vand.u32 %v1502, 65535
        %v1504 = vshra.s32 %v1502, 16
        %v1505 = vcvt.s32.f32 %v1503
        %v1506 = vcvt.s32.f32 %v1504
        %1507 = vmin.xlane.f32.xlu0 %v1506
        %v1508 = vpop.xlane.xlu0 %1507
        %vm1509 = vcmp.eq.f32.partialorder %v1506, %v1508
        %v1510 = vsel %vm1509, %v1505, inf
        %1511 = vmin.xlane.f32.xlu0 %v1510
        %v1512 = vpop.xlane.xlu0 %1511
        %v1513 = vcvt.f32.s32 %v1512
        %v1514 = vcvt.f32.s32 %v1508
        %v1515 = vshll.u32 %v1514, 16
        %v1516 = vadd.s32 %v1515, %v1513
        %vm1517 = vcmp.lt.s32.totalorder %v1075, %v1076
        %v1518 = vsel %vm1517, %v1075, %v1076
        %v1519 = vand.u32 %v1518, 65535
        %v1520 = vshra.s32 %v1518, 16
        %v1521 = vcvt.s32.f32 %v1519
        %v1522 = vcvt.s32.f32 %v1520
        %1523 = vmin.xlane.f32.xlu0 %v1522
        %v1524 = vpop.xlane.xlu0 %1523
        %vm1525 = vcmp.eq.f32.partialorder %v1522, %v1524
        %v1526 = vsel %vm1525, %v1521, inf
        %1527 = vmin.xlane.f32.xlu0 %v1526
        %v1528 = vpop.xlane.xlu0 %1527
        %v1529 = vcvt.f32.s32 %v1528
        %v1530 = vcvt.f32.s32 %v1524
        %v1531 = vshll.u32 %v1530, 16
        %v1532 = vadd.s32 %v1531, %v1529
        %vm1533 = vcmp.lt.s32.totalorder %v1077, %v1078
        %v1534 = vsel %vm1533, %v1077, %v1078
        %v1535 = vand.u32 %v1534, 65535
        %v1536 = vshra.s32 %v1534, 16
        %v1537 = vcvt.s32.f32 %v1535
        %v1538 = vcvt.s32.f32 %v1536
        %1539 = vmin.xlane.f32.xlu0 %v1538
        %v1540 = vpop.xlane.xlu0 %1539
        %vm1541 = vcmp.eq.f32.partialorder %v1538, %v1540
        %v1542 = vsel %vm1541, %v1537, inf
        %1543 = vmin.xlane.f32.xlu0 %v1542
        %v1544 = vpop.xlane.xlu0 %1543
        %v1545 = vcvt.f32.s32 %v1544
        %v1546 = vcvt.f32.s32 %v1540
        %v1547 = vshll.u32 %v1546, 16
        %v1548 = vadd.s32 %v1547, %v1545
        %vm1549 = vcmp.lt.s32.totalorder %v1079, %v1080
        %v1550 = vsel %vm1549, %v1079, %v1080
        %v1551 = vand.u32 %v1550, 65535
        %v1552 = vshra.s32 %v1550, 16
        %v1553 = vcvt.s32.f32 %v1551
        %v1554 = vcvt.s32.f32 %v1552
        %1555 = vmin.xlane.f32.xlu0 %v1554
        %v1556 = vpop.xlane.xlu0 %1555
        %vm1557 = vcmp.eq.f32.partialorder %v1554, %v1556
        %v1558 = vsel %vm1557, %v1553, inf
        %1559 = vmin.xlane.f32.xlu0 %v1558
        %v1560 = vpop.xlane.xlu0 %1559
        %v1561 = vcvt.f32.s32 %v1560
        %v1562 = vcvt.f32.s32 %v1556
        %v1563 = vshll.u32 %v1562, 16
        %v1564 = vadd.s32 %v1563, %v1561
        %vm1565 = vcmp.lt.s32.totalorder %v1081, %v1082
        %v1566 = vsel %vm1565, %v1081, %v1082
        %v1567 = vand.u32 %v1566, 65535
        %v1568 = vshra.s32 %v1566, 16
        %v1569 = vcvt.s32.f32 %v1567
        %v1570 = vcvt.s32.f32 %v1568
        %1571 = vmin.xlane.f32.xlu0 %v1570
        %v1572 = vpop.xlane.xlu0 %1571
        %vm1573 = vcmp.eq.f32.partialorder %v1570, %v1572
        %v1574 = vsel %vm1573, %v1569, inf
        %1575 = vmin.xlane.f32.xlu0 %v1574
        %v1576 = vpop.xlane.xlu0 %1575
        %v1577 = vcvt.f32.s32 %v1576
        %v1578 = vcvt.f32.s32 %v1572
        %v1579 = vshll.u32 %v1578, 16
        %v1580 = vadd.s32 %v1579, %v1577
        %vm1581 = vcmp.lt.s32.totalorder %v1083, %v1084
        %v1582 = vsel %vm1581, %v1083, %v1084
        %v1583 = vand.u32 %v1582, 65535
        %v1584 = vshra.s32 %v1582, 16
        %v1585 = vcvt.s32.f32 %v1583
        %v1586 = vcvt.s32.f32 %v1584
        %1587 = vmin.xlane.f32.xlu0 %v1586
        %v1588 = vpop.xlane.xlu0 %1587
        %vm1589 = vcmp.eq.f32.partialorder %v1586, %v1588
        %v1590 = vsel %vm1589, %v1585, inf
        %1591 = vmin.xlane.f32.xlu0 %v1590
        %v1592 = vpop.xlane.xlu0 %1591
        %v1593 = vcvt.f32.s32 %v1592
        %v1594 = vcvt.f32.s32 %v1588
        %v1595 = vshll.u32 %v1594, 16
        %v1596 = vadd.s32 %v1595, %v1593
        %vm1597 = vcmp.lt.f32.partialorder %v863, %v534
        %vm1598 = vcmp.lt.f32.partialorder %v866, %v535
        %vm1599 = vcmp.lt.f32.partialorder %v869, %v536
        %vm1600 = vcmp.lt.f32.partialorder %v872, %v537
        %vm1601 = vcmp.lt.f32.partialorder %v875, %v538
        %vm1602 = vcmp.lt.f32.partialorder %v878, %v539
        %vm1603 = vcmp.lt.f32.partialorder %v881, %v540
        %vm1604 = vcmp.lt.f32.partialorder %v884, %v541
        %vm1605 = vcmp.lt.f32.partialorder %v887, %v542
        %vm1606 = vcmp.lt.f32.partialorder %v890, %v543
        %vm1607 = vcmp.lt.f32.partialorder %v893, %v544
        %vm1608 = vcmp.lt.f32.partialorder %v896, %v545
        %vm1609 = vcmp.lt.f32.partialorder %v899, %v546
        %vm1610 = vcmp.lt.f32.partialorder %v902, %v547
        %vm1611 = vcmp.lt.f32.partialorder %v905, %v548
        %vm1612 = vcmp.lt.f32.partialorder %v908, %v549
        %vm1613 = vcmp.lt.f32.partialorder %v911, %v550
        %vm1614 = vcmp.lt.f32.partialorder %v914, %v551
        %vm1615 = vcmp.lt.f32.partialorder %v917, %v552
        %vm1616 = vcmp.lt.f32.partialorder %v920, %v553
        %vm1617 = vcmp.lt.f32.partialorder %v923, %v554
        %vm1618 = vcmp.lt.f32.partialorder %v926, %v555
        %vm1619 = vcmp.lt.f32.partialorder %v929, %v556
        %vm1620 = vcmp.lt.f32.partialorder %v932, %v557
        %vm1621 = vcmp.lt.f32.partialorder %v935, %v558
        %vm1622 = vcmp.lt.f32.partialorder %v938, %v559
        %vm1623 = vcmp.lt.f32.partialorder %v941, %v560
        %vm1624 = vcmp.lt.f32.partialorder %v944, %v561
        %vm1625 = vcmp.lt.f32.partialorder %v947, %v562
        %vm1626 = vcmp.lt.f32.partialorder %v950, %v563
        %vm1627 = vcmp.lt.f32.partialorder %v953, %v564
        %vm1628 = vcmp.lt.f32.partialorder %v956, %v565
        %v1629 = vstv %s598
        %v1630 = vadd.s32 %v1100, %v1629
        %v1631 = vadd.s32 %v1116, %v1629
        %v1632 = vadd.s32 %v1132, %v1629
        %v1633 = vadd.s32 %v1148, %v1629
        %v1634 = vadd.s32 %v1164, %v1629
        %v1635 = vadd.s32 %v1180, %v1629
        %v1636 = vadd.s32 %v1196, %v1629
        %v1637 = vadd.s32 %v1212, %v1629
        %v1638 = vadd.s32 %v1228, %v1629
        %v1639 = vadd.s32 %v1244, %v1629
        %v1640 = vadd.s32 %v1260, %v1629
        %v1641 = vadd.s32 %v1276, %v1629
        %v1642 = vadd.s32 %v1292, %v1629
        %v1643 = vadd.s32 %v1308, %v1629
        %v1644 = vadd.s32 %v1324, %v1629
        %v1645 = vadd.s32 %v1340, %v1629
        %v1646 = vadd.s32 %v1356, %v1629
        %v1647 = vadd.s32 %v1372, %v1629
        %v1648 = vadd.s32 %v1388, %v1629
        %v1649 = vadd.s32 %v1404, %v1629
        %v1650 = vadd.s32 %v1420, %v1629
        %v1651 = vadd.s32 %v1436, %v1629
        %v1652 = vadd.s32 %v1452, %v1629
        %v1653 = vadd.s32 %v1468, %v1629
        %v1654 = vadd.s32 %v1484, %v1629
        %v1655 = vadd.s32 %v1500, %v1629
        %v1656 = vadd.s32 %v1516, %v1629
        %v1657 = vadd.s32 %v1532, %v1629
        %v1658 = vadd.s32 %v1548, %v1629
        %v1659 = vadd.s32 %v1564, %v1629
        %v1660 = vadd.s32 %v1580, %v1629
        %v1661 = vadd.s32 %v1596, %v1629
        %v1662 = vsel %vm1597, %v1630, %v566
        %v1663 = vsel %vm1598, %v1631, %v567
        %v1664 = vsel %vm1599, %v1632, %v568
        %v1665 = vsel %vm1600, %v1633, %v569
        %v1666 = vsel %vm1601, %v1634, %v570
        %v1667 = vsel %vm1602, %v1635, %v571
        %v1668 = vsel %vm1603, %v1636, %v572
        %v1669 = vsel %vm1604, %v1637, %v573
        %v1670 = vsel %vm1605, %v1638, %v574
        %v1671 = vsel %vm1606, %v1639, %v575
        %v1672 = vsel %vm1607, %v1640, %v576
        %v1673 = vsel %vm1608, %v1641, %v577
        %v1674 = vsel %vm1609, %v1642, %v578
        %v1675 = vsel %vm1610, %v1643, %v579
        %v1676 = vsel %vm1611, %v1644, %v580
        %v1677 = vsel %vm1612, %v1645, %v581
        %v1678 = vsel %vm1613, %v1646, %v582
        %v1679 = vsel %vm1614, %v1647, %v583
        %v1680 = vsel %vm1615, %v1648, %v584
        %v1681 = vsel %vm1616, %v1649, %v585
        %v1682 = vsel %vm1617, %v1650, %v586
        %v1683 = vsel %vm1618, %v1651, %v587
        %v1684 = vsel %vm1619, %v1652, %v588
        %v1685 = vsel %vm1620, %v1653, %v589
        %v1686 = vsel %vm1621, %v1654, %v590
        %v1687 = vsel %vm1622, %v1655, %v591
        %v1688 = vsel %vm1623, %v1656, %v592
        %v1689 = vsel %vm1624, %v1657, %v593
        %v1690 = vsel %vm1625, %v1658, %v594
        %v1691 = vsel %vm1626, %v1659, %v595
        %v1692 = vsel %vm1627, %v1660, %v596
        %v1693 = vsel %vm1628, %v1661, %v597
        %v1694 = vmin.f32 %v534, %v863
        %v1695 = vmin.f32 %v535, %v866
        %v1696 = vmin.f32 %v536, %v869
        %v1697 = vmin.f32 %v537, %v872
        %v1698 = vmin.f32 %v538, %v875
        %v1699 = vmin.f32 %v539, %v878
        %v1700 = vmin.f32 %v540, %v881
        %v1701 = vmin.f32 %v541, %v884
        %v1702 = vmin.f32 %v542, %v887
        %v1703 = vmin.f32 %v543, %v890
        %v1704 = vmin.f32 %v544, %v893
        %v1705 = vmin.f32 %v545, %v896
        %v1706 = vmin.f32 %v546, %v899
        %v1707 = vmin.f32 %v547, %v902
        %v1708 = vmin.f32 %v548, %v905
        %v1709 = vmin.f32 %v549, %v908
        %v1710 = vmin.f32 %v550, %v911
        %v1711 = vmin.f32 %v551, %v914
        %v1712 = vmin.f32 %v552, %v917
        %v1713 = vmin.f32 %v553, %v920
        %v1714 = vmin.f32 %v554, %v923
        %v1715 = vmin.f32 %v555, %v926
        %v1716 = vmin.f32 %v556, %v929
        %v1717 = vmin.f32 %v557, %v932
        %v1718 = vmin.f32 %v558, %v935
        %v1719 = vmin.f32 %v559, %v938
        %v1720 = vmin.f32 %v560, %v941
        %v1721 = vmin.f32 %v561, %v944
        %v1722 = vmin.f32 %v562, %v947
        %v1723 = vmin.f32 %v563, %v950
        %v1724 = vmin.f32 %v564, %v953
        %v1725 = vmin.f32 %v565, %v956
      $region45: #{vq_forward.3} parent=39 // loop_footer
        %s533 = sadd.s32 1, %s529
      $region46: #{vq_forward.3} parent=39 // loop_footer_branch
        %528 = sbr.rel target = $region42
      $region47: #{vq_forward.3} parent=39 // loop_exit
        _
      %vm1726 = vcmask 7168
      %1727 = vst.msk [vmem:[%s226] sm:$0xff] %vm1726, %v566
      %1728 = vst.msk [vmem:[%s226 + $0x8] sm:$0xff] %vm1726, %v567
      %1729 = vst.msk [vmem:[%s226 + $0x10] sm:$0xff] %vm1726, %v568
      %1730 = vst.msk [vmem:[%s226 + $0x18] sm:$0xff] %vm1726, %v569
      %1731 = vst.msk [vmem:[%s226 + $0x20] sm:$0xff] %vm1726, %v570
      %1732 = vst.msk [vmem:[%s226 + $0x28] sm:$0xff] %vm1726, %v571
      %1733 = vst.msk [vmem:[%s226 + $0x30] sm:$0xff] %vm1726, %v572
      %1734 = vst.msk [vmem:[%s226 + $0x38] sm:$0xff] %vm1726, %v573
      %1735 = vst.msk [vmem:[%s226 + $0x40] sm:$0xff] %vm1726, %v574
      %1736 = vst.msk [vmem:[%s226 + $0x48] sm:$0xff] %vm1726, %v575
      %1737 = vst.msk [vmem:[%s226 + $0x50] sm:$0xff] %vm1726, %v576
      %1738 = vst.msk [vmem:[%s226 + $0x58] sm:$0xff] %vm1726, %v577
      %1739 = vst.msk [vmem:[%s226 + $0x60] sm:$0xff] %vm1726, %v578
      %1740 = vst.msk [vmem:[%s226 + $0x68] sm:$0xff] %vm1726, %v579
      %1741 = vst.msk [vmem:[%s226 + $0x70] sm:$0xff] %vm1726, %v580
      %1742 = vst.msk [vmem:[%s226 + $0x78] sm:$0xff] %vm1726, %v581
      %1743 = vst.msk [vmem:[%s226 + $0x80] sm:$0xff] %vm1726, %v582
      %1744 = vst.msk [vmem:[%s226 + $0x88] sm:$0xff] %vm1726, %v583
      %1745 = vst.msk [vmem:[%s226 + $0x90] sm:$0xff] %vm1726, %v584
      %1746 = vst.msk [vmem:[%s226 + $0x98] sm:$0xff] %vm1726, %v585
      %1747 = vst.msk [vmem:[%s226 + $0xa0] sm:$0xff] %vm1726, %v586
      %1748 = vst.msk [vmem:[%s226 + $0xa8] sm:$0xff] %vm1726, %v587
      %1749 = vst.msk [vmem:[%s226 + $0xb0] sm:$0xff] %vm1726, %v588
      %1750 = vst.msk [vmem:[%s226 + $0xb8] sm:$0xff] %vm1726, %v589
      %1751 = vst.msk [vmem:[%s226 + $0xc0] sm:$0xff] %vm1726, %v590
      %1752 = vst.msk [vmem:[%s226 + $0xc8] sm:$0xff] %vm1726, %v591
      %1753 = vst.msk [vmem:[%s226 + $0xd0] sm:$0xff] %vm1726, %v592
      %1754 = vst.msk [vmem:[%s226 + $0xd8] sm:$0xff] %vm1726, %v593
      %1755 = vst.msk [vmem:[%s226 + $0xe0] sm:$0xff] %vm1726, %v594
      %1756 = vst.msk [vmem:[%s226 + $0xe8] sm:$0xff] %vm1726, %v595
      %1757 = vst.msk [vmem:[%s226 + $0xf0] sm:$0xff] %vm1726, %v596
      %1758 = vst.msk [vmem:[%s226 + $0xf8] sm:$0xff] %vm1726, %v597
      %s1759 = smul.u32 32, %s16
      %p1760 = scmp.lt.s32.totalorder %s1759, 63
      %s1761 = scalar_select %p1760, %s1759, 63
      %s1762 = smul.addr %s1761, 8
      %s1763 = scalar_lea.vmem %s5, %s1762
      // Predicated region
      $region48: #{vq_forward.3} parent=39 // pred_check
        %p1764 = pneg %p144
      $region49: #{vq_forward.3} parent=39 // pred_check_branch
        %1766 = sbr.rel (%p1764) target = $region51
      $region50: #{vq_forward.3} parent=39 // pred_region
        %s1767 = smul.u32 32, %s16
      $region51: #{vq_forward.3} parent=39 // pred_fallthru
        _
    $region40: #{vq_forward.3} parent=5 // pred_fallthru
      _
    %p1768 = scmp.le.s32.totalorder 2, %s11
    // Predicated region
    $region52: #{vq_forward.3} parent=5 // pred_check
      %p1769 = pneg %p1768
    $region53: #{vq_forward.3} parent=5 // pred_check_branch
      %1771 = sbr.rel (%p1769) target = $region55
    $region54: #{vq_forward.3} parent=5 // pred_region
      %s1772 = ssub.s32 %s11, 2
      // Predicated region
      $region56: #{vq_forward.3} parent=54 // pred_check
        %p1773 = pneg %p150
      $region57: #{vq_forward.3} parent=54 // pred_check_branch
        %1775 = sbr.rel (%p1773) target = $region59
      $region58: #{vq_forward.3} parent=54 // pred_region
        %s1776 = smul.u32 32, %s17
        %p1777 = scmp.lt.s32.totalorder %s1776, 63
        %s1778 = scalar_select %p1777, %s1776, 63
        %s1779 = smul.addr %s1778, 8
        %s1780 = scalar_lea.vmem %s5, %s1779
      $region59: #{vq_forward.3} parent=54 // pred_fallthru
        _
    $region55: #{vq_forward.3} parent=5 // pred_fallthru
      _
  $region6: #{vq_forward.3} parent=0 // loop_footer
    %s15 = sadd.s32 1, %s11
  $region7: #{vq_forward.3} parent=0 // loop_footer_branch
    %10 = sbr.rel target = $region3
  $region8: #{vq_forward.3} parent=0 // loop_exit
    _

// kernel: squeeze.3
$region0: #{squeeze.3}
  %s0 = inlined_call_operand.vmem [shape: s32[512], index: 0, kind: input, shape index: {}]
  %s1 = inlined_call_operand.hbm [shape: s32[2,256], index: 1, kind: output, shape index: {}]
  $region1: #{squeeze.3} parent=0
    #allocation0 [shape = 'u8[2048]{0}', space=vmem, size = 0x800, scoped, tag = 'operand span for operand 1']
    #allocation1 [shape = 's32[1]{0}', space=sflag, size = 0x4, scoped, tag = 'scoped memory for squeeze.3']
    #allocation2 [shape = 'u8[8192]{0}', space=vmem, size = 0x2000, scoped, tag = 'scoped mem for output reshape']
    #allocation3 [shape = 'u8[4096]{0}', space=vmem, size = 0x1000, scoped, tag = 'scoped mem for input reshape']
    %2 = vsyncpa [#allocation1], 0
    %s4 = ssub.s32 16, 1
    %v5 = vld [vmem:[%s0] sm:%s4]
    %6 = vst [vmem:[#allocation3] sm:%s4] %v5
    %v7 = vld [vmem:[#allocation3] sm:$0xf]
    %8 = vst [vmem:[#allocation2] ss:$8 sm:$0x3] %v7
    %s9 = scalar_lea.vmem [#allocation2], 4294967281
    %10 = vst [vmem:[%s9] ss:$8 sm:$0xc] %v7
    %s12 = ssub.s32 4, 1
    %v13 = vld [vmem:[#allocation2] sm:%s12]
    %s15 = ssub.s32 4, 1
    %16 = vst [vmem:[#allocation0] sm:%s15] %v13
    %s17 = scalar_lea.vmem [#allocation2], 8
    %v18 = vld [vmem:[%s17] sm:%s12]
    %s20 = ssub.s32 4, 1
    %s21 = scalar_lea.vmem [#allocation0], 2
    %22 = vst [vmem:[%s21] sm:%s20] %v18
    %24 = vsyncadd [#allocation1], 0
    %s26 = sshll.u32 [#allocation0], 4
    %s27 = int_to_ptr.vmem [resolvable:$true] %s26
    %s28 = sshll.u32 %s1, 4
    %s29 = int_to_ptr.hbm [resolvable:$true] %s28
    %31 = dma.vmem_to_hbm [thread:$0]  %s27, 64, %s29, [#allocation1]
    %33 = dma.done [#allocation1], 64
    %34 = vsyncpa [#allocation1], 1

</llo_original>
